<compile_context>
chip_gen: v7x
topology: tpu7x:2x2x1
jax: 0.10.0
libtpu: 0.0.40
codegen_flags: <defaults>
</compile_context>

<pallas_src>
import jax
import jax.numpy as jnp
from jax.experimental import pallas as pl
from jax.experimental.pallas import tpu as pltpu

# (in_dim, padded_in, out_dim, padded_out) for each layer.
LAYER_DIMS = [
    (784, 896, 500, 512),
    (500, 512, 250, 256),
    (250, 256, 125, 128),
    (125, 128, 10, 128),
]
D_IN, D_IN_PAD = 784, 896
D_OUT, D_OUT_PAD = 10, 128


def _round_up(x, m):
    return ((x + m - 1) // m) * m


def mlp_kernel(x_ref,
               w1_ref, b1_ref,
               w2_ref, b2_ref,
               w3_ref, b3_ref,
               w4_ref, b4_ref,
               o_ref):
    # Layer 1: Linear(896 -> 512) + ReLU   (bf16 operands, f32 accumulate/epilogue)
    h = jnp.dot(x_ref[...].astype(jnp.bfloat16), w1_ref[...],
                preferred_element_type=jnp.float32)
    h = jnp.maximum(h + b1_ref[...], 0.0)
    # Layer 2: Linear(512 -> 256) + ReLU
    h = jnp.dot(h.astype(jnp.bfloat16), w2_ref[...],
                preferred_element_type=jnp.float32)
    h = jnp.maximum(h + b2_ref[...], 0.0)
    # Layer 3: Linear(256 -> 128) + ReLU
    h = jnp.dot(h.astype(jnp.bfloat16), w3_ref[...],
                preferred_element_type=jnp.float32)
    h = jnp.maximum(h + b3_ref[...], 0.0)
    # Layer 4: Linear(128 -> 128), no activation (lane-dense output slab)
    h = jnp.dot(h.astype(jnp.bfloat16), w4_ref[...],
                preferred_element_type=jnp.float32)
    o_ref[...] = (h + b4_ref[...]).astype(o_ref.dtype)


def prepare_params(params):
    """One-time weight prep: transpose PyTorch [out,in] -> [in,out], zero-pad to
    128-multiples, cast weights to bf16. Biases stay f32, shape [1, out_pad]."""
    prepped = {}
    for i, (din, din_p, dout, dout_p) in enumerate(LAYER_DIMS, start=1):
        w = params[f"w{i}"].T                                    # [in, out]
        w = jnp.pad(w, ((0, din_p - din), (0, dout_p - dout)))
        b = jnp.pad(params[f"b{i}"], (0, dout_p - dout)).reshape(1, -1)
        prepped[f"w{i}"] = w.astype(jnp.bfloat16)
        prepped[f"b{i}"] = b.astype(jnp.float32)
    return prepped


def mlp_forward(x, prepped, *, max_batch_tile=256):
    """x: [B, 784] float32. prepped: output of prepare_params (call once)."""
    B = x.shape[0]
    # Batch tile: multiple of 8 sublanes, capped so VMEM (incl. double buffers)
    # comfortably fits even on v7x's 64 MiB.
    TB = min(max_batch_tile, _round_up(max(B, 1), 8))
    B_pad = _round_up(B, TB)
    x_p = jnp.pad(x, ((0, B_pad - B), (0, D_IN_PAD - D_IN)))

    resident = lambda shape: pl.BlockSpec(shape, lambda b: (0, 0))

    out = pl.pallas_call(
        mlp_kernel,
        out_shape=jax.ShapeDtypeStruct((B_pad, D_OUT_PAD), jnp.float32),
        grid=(B_pad // TB,),
        in_specs=[
            pl.BlockSpec((TB, D_IN_PAD), lambda b: (b, 0)),      # streamed x tile
            resident(prepped["w1"].shape), resident(prepped["b1"].shape),
            resident(prepped["w2"].shape), resident(prepped["b2"].shape),
            resident(prepped["w3"].shape), resident(prepped["b3"].shape),
            resident(prepped["w4"].shape), resident(prepped["b4"].shape),
        ],
        out_specs=pl.BlockSpec((TB, D_OUT_PAD), lambda b: (b, 0)),
        compiler_params=pltpu.CompilerParams(
            dimension_semantics=("parallel",),
            vmem_limit_bytes=32 << 20,
        ),
    )(x_p,
      prepped["w1"], prepped["b1"],
      prepped["w2"], prepped["b2"],
      prepped["w3"], prepped["b3"],
      prepped["w4"], prepped["b4"])
    return out[:B, :D_OUT]


def init_params(key):
    """Deterministic init matching nn.Linear shapes (Kaiming-uniform-like)."""
    dims = [(500, 784), (250, 500), (125, 250), (10, 125)]
    params = {}
    for i, (out_d, in_d) in enumerate(dims, start=1):
        key, kw, kb = jax.random.split(key, 3)
        bound = 1.0 / (in_d ** 0.5)
        params[f"w{i}"] = jax.random.uniform(
            kw, (out_d, in_d), jnp.float32, minval=-bound, maxval=bound)
        params[f"b{i}"] = jax.random.uniform(
            kb, (out_d,), jnp.float32, minval=-bound, maxval=bound)
    return params


def mlp_reference(x, params):
    """Reference matching the kernel's mixed precision (bf16 matmul operands,
    f32 accumulation and epilogue)."""
    h = x
    for i in range(1, 5):
        w = params[f"w{i}"].T.astype(jnp.bfloat16)
        b = params[f"b{i}"].astype(jnp.float32)
        h = jnp.dot(h.astype(jnp.bfloat16), w,
                    preferred_element_type=jnp.float32) + b
        if i < 4:
            h = jnp.maximum(h, 0.0)
    return h


if __name__ == "__main__":
    key = jax.random.PRNGKey(0)
    key, kx = jax.random.split(key)
    B = 8  # small batch; kernel pads batch/lanes internally
    x = jax.random.normal(kx, (B, 28 * 28), jnp.float32)  # flattened MNIST images

    params = init_params(key)
    prepped = prepare_params(params)   # one-time weight layout/cast (hoisted)

    out = mlp_forward(x, prepped)
    out = jax.block_until_ready(out)

    ref = mlp_reference(x, params)
    assert out.shape == (B, 10), out.shape
    assert jnp.allclose(out, ref, atol=2e-3, rtol=2e-3), "mismatch vs reference"

    print("KERNEL_OK")
</pallas_src>

<mosaic_0001>
module attributes {stable_mosaic.version = 11 : i64} {
  func.func @mlp_kernel(%arg0: i32, %arg1: memref<8x896xf32, #tpu.memory_space<vmem>>, %arg2: memref<896x512xbf16, #tpu.memory_space<vmem>>, %arg3: memref<1x512xf32, #tpu.memory_space<vmem>>, %arg4: memref<512x256xbf16, #tpu.memory_space<vmem>>, %arg5: memref<1x256xf32, #tpu.memory_space<vmem>>, %arg6: memref<256x128xbf16, #tpu.memory_space<vmem>>, %arg7: memref<1x128xf32, #tpu.memory_space<vmem>>, %arg8: memref<128x128xbf16, #tpu.memory_space<vmem>>, %arg9: memref<1x128xf32, #tpu.memory_space<vmem>>, %arg10: memref<8x128xf32, #tpu.memory_space<vmem>>) attributes {dimension_semantics = [#tpu.dimension_semantics<parallel>], iteration_bounds = array<i64: 1>, scalar_prefetch = 0 : i64, scratch_operands = 0 : i64, tpu.core_type = #tpu.core_type<tc>, window_params = [{transform_indices = @transform_0, window_bounds = array<i64: 8, 896>}, {pipeline_mode = #tpu.pipeline_mode<synchronous>, transform_indices = @transform_1, window_bounds = array<i64: 896, 512>}, {pipeline_mode = #tpu.pipeline_mode<synchronous>, transform_indices = @transform_2, window_bounds = array<i64: 1, 512>}, {pipeline_mode = #tpu.pipeline_mode<synchronous>, transform_indices = @transform_3, window_bounds = array<i64: 512, 256>}, {pipeline_mode = #tpu.pipeline_mode<synchronous>, transform_indices = @transform_4, window_bounds = array<i64: 1, 256>}, {pipeline_mode = #tpu.pipeline_mode<synchronous>, transform_indices = @transform_5, window_bounds = array<i64: 256, 128>}, {pipeline_mode = #tpu.pipeline_mode<synchronous>, transform_indices = @transform_6, window_bounds = array<i64: 1, 128>}, {pipeline_mode = #tpu.pipeline_mode<synchronous>, transform_indices = @transform_7, window_bounds = array<i64: 128, 128>}, {pipeline_mode = #tpu.pipeline_mode<synchronous>, transform_indices = @transform_8, window_bounds = array<i64: 1, 128>}, {transform_indices = @transform_9, window_bounds = array<i64: 8, 128>}]} {
    %c0 = arith.constant 0 : index
    %c0_0 = arith.constant 0 : index
    %0 = vector.load %arg1[%c0, %c0_0] : memref<8x896xf32, #tpu.memory_space<vmem>>, vector<8x896xf32>
    %1 = arith.truncf %0 : vector<8x896xf32> to vector<8x896xbf16>
    %c0_1 = arith.constant 0 : index
    %c0_2 = arith.constant 0 : index
    %2 = vector.load %arg2[%c0_1, %c0_2] : memref<896x512xbf16, #tpu.memory_space<vmem>>, vector<896x512xbf16>
    %cst = arith.constant dense<0.000000e+00> : vector<8x512xf32>
    %3 = tpu.matmul %1, %2, %cst {dimension_numbers = #tpu.dot_dimension_numbers<[1], [0], [0], [1], [0, 0, 1, 1], [], []>} : vector<8x896xbf16>, vector<896x512xbf16>, vector<8x512xf32> -> vector<8x512xf32>
    %c0_3 = arith.constant 0 : index
    %c0_4 = arith.constant 0 : index
    %4 = vector.load %arg3[%c0_3, %c0_4] : memref<1x512xf32, #tpu.memory_space<vmem>>, vector<1x512xf32>
    %5 = vector.broadcast %4 : vector<1x512xf32> to vector<8x512xf32>
    %6 = arith.addf %3, %5 : vector<8x512xf32>
    %cst_5 = arith.constant 0.000000e+00 : f32
    %7 = vector.broadcast %cst_5 : f32 to vector<8x512xf32>
    %8 = arith.maximumf %6, %7 : vector<8x512xf32>
    %9 = arith.truncf %8 : vector<8x512xf32> to vector<8x512xbf16>
    %c0_6 = arith.constant 0 : index
    %c0_7 = arith.constant 0 : index
    %10 = vector.load %arg4[%c0_6, %c0_7] : memref<512x256xbf16, #tpu.memory_space<vmem>>, vector<512x256xbf16>
    %cst_8 = arith.constant dense<0.000000e+00> : vector<8x256xf32>
    %11 = tpu.matmul %9, %10, %cst_8 {dimension_numbers = #tpu.dot_dimension_numbers<[1], [0], [0], [1], [0, 0, 1, 1], [], []>} : vector<8x512xbf16>, vector<512x256xbf16>, vector<8x256xf32> -> vector<8x256xf32>
    %c0_9 = arith.constant 0 : index
    %c0_10 = arith.constant 0 : index
    %12 = vector.load %arg5[%c0_9, %c0_10] : memref<1x256xf32, #tpu.memory_space<vmem>>, vector<1x256xf32>
    %13 = vector.broadcast %12 : vector<1x256xf32> to vector<8x256xf32>
    %14 = arith.addf %11, %13 : vector<8x256xf32>
    %cst_11 = arith.constant 0.000000e+00 : f32
    %15 = vector.broadcast %cst_11 : f32 to vector<8x256xf32>
    %16 = arith.maximumf %14, %15 : vector<8x256xf32>
    %17 = arith.truncf %16 : vector<8x256xf32> to vector<8x256xbf16>
    %c0_12 = arith.constant 0 : index
    %c0_13 = arith.constant 0 : index
    %18 = vector.load %arg6[%c0_12, %c0_13] : memref<256x128xbf16, #tpu.memory_space<vmem>>, vector<256x128xbf16>
    %cst_14 = arith.constant dense<0.000000e+00> : vector<8x128xf32>
    %19 = tpu.matmul %17, %18, %cst_14 {dimension_numbers = #tpu.dot_dimension_numbers<[1], [0], [0], [1], [0, 0, 1, 1], [], []>} : vector<8x256xbf16>, vector<256x128xbf16>, vector<8x128xf32> -> vector<8x128xf32>
    %c0_15 = arith.constant 0 : index
    %c0_16 = arith.constant 0 : index
    %20 = vector.load %arg7[%c0_15, %c0_16] : memref<1x128xf32, #tpu.memory_space<vmem>>, vector<1x128xf32>
    %21 = vector.broadcast %20 : vector<1x128xf32> to vector<8x128xf32>
    %22 = arith.addf %19, %21 : vector<8x128xf32>
    %cst_17 = arith.constant 0.000000e+00 : f32
    %23 = vector.broadcast %cst_17 : f32 to vector<8x128xf32>
    %24 = arith.maximumf %22, %23 : vector<8x128xf32>
    %25 = arith.truncf %24 : vector<8x128xf32> to vector<8x128xbf16>
    %c0_18 = arith.constant 0 : index
    %c0_19 = arith.constant 0 : index
    %26 = vector.load %arg8[%c0_18, %c0_19] : memref<128x128xbf16, #tpu.memory_space<vmem>>, vector<128x128xbf16>
    %cst_20 = arith.constant dense<0.000000e+00> : vector<8x128xf32>
    %27 = tpu.matmul %25, %26, %cst_20 {dimension_numbers = #tpu.dot_dimension_numbers<[1], [0], [0], [1], [0, 0, 1, 1], [], []>} : vector<8x128xbf16>, vector<128x128xbf16>, vector<8x128xf32> -> vector<8x128xf32>
    %c0_21 = arith.constant 0 : index
    %c0_22 = arith.constant 0 : index
    %28 = vector.load %arg9[%c0_21, %c0_22] : memref<1x128xf32, #tpu.memory_space<vmem>>, vector<1x128xf32>
    %29 = vector.broadcast %28 : vector<1x128xf32> to vector<8x128xf32>
    %30 = arith.addf %27, %29 : vector<8x128xf32>
    %c0_23 = arith.constant 0 : index
    %c0_24 = arith.constant 0 : index
    %31 = vector.load %arg10[%c0_23, %c0_24] : memref<8x128xf32, #tpu.memory_space<vmem>>, vector<8x128xf32>
    tpu.vector_store %arg10[%c0_23, %c0_24], %30 {strides = array<i32>} : memref<8x128xf32, #tpu.memory_space<vmem>>, vector<8x128xf32>,
    return
  }
  func.func @transform_0(%arg0: i32) -> (i32, i32) {
    %c0_i32 = arith.constant 0 : i32
    %c0_i32_0 = arith.constant 0 : i32
    return %arg0, %c0_i32 : i32, i32
  }
  func.func @transform_1(%arg0: i32) -> (i32, i32) {
    %c0_i32 = arith.constant 0 : i32
    %c0_i32_0 = arith.constant 0 : i32
    %c0_i32_1 = arith.constant 0 : i32
    return %c0_i32, %c0_i32_0 : i32, i32
  }
  func.func @transform_2(%arg0: i32) -> (i32, i32) {
    %c0_i32 = arith.constant 0 : i32
    %c0_i32_0 = arith.constant 0 : i32
    %c0_i32_1 = arith.constant 0 : i32
    return %c0_i32, %c0_i32_0 : i32, i32
  }
  func.func @transform_3(%arg0: i32) -> (i32, i32) {
    %c0_i32 = arith.constant 0 : i32
    %c0_i32_0 = arith.constant 0 : i32
    %c0_i32_1 = arith.constant 0 : i32
    return %c0_i32, %c0_i32_0 : i32, i32
  }
  func.func @transform_4(%arg0: i32) -> (i32, i32) {
    %c0_i32 = arith.constant 0 : i32
    %c0_i32_0 = arith.constant 0 : i32
    %c0_i32_1 = arith.constant 0 : i32
    return %c0_i32, %c0_i32_0 : i32, i32
  }
  func.func @transform_5(%arg0: i32) -> (i32, i32) {
    %c0_i32 = arith.constant 0 : i32
    %c0_i32_0 = arith.constant 0 : i32
    %c0_i32_1 = arith.constant 0 : i32
    return %c0_i32, %c0_i32_0 : i32, i32
  }
  func.func @transform_6(%arg0: i32) -> (i32, i32) {
    %c0_i32 = arith.constant 0 : i32
    %c0_i32_0 = arith.constant 0 : i32
    %c0_i32_1 = arith.constant 0 : i32
    return %c0_i32, %c0_i32_0 : i32, i32
  }
  func.func @transform_7(%arg0: i32) -> (i32, i32) {
    %c0_i32 = arith.constant 0 : i32
    %c0_i32_0 = arith.constant 0 : i32
    %c0_i32_1 = arith.constant 0 : i32
    return %c0_i32, %c0_i32_0 : i32, i32
  }
  func.func @transform_8(%arg0: i32) -> (i32, i32) {
    %c0_i32 = arith.constant 0 : i32
    %c0_i32_0 = arith.constant 0 : i32
    %c0_i32_1 = arith.constant 0 : i32
    return %c0_i32, %c0_i32_0 : i32, i32
  }
  func.func @transform_9(%arg0: i32) -> (i32, i32) {
    %c0_i32 = arith.constant 0 : i32
    %c0_i32_0 = arith.constant 0 : i32
    return %arg0, %c0_i32 : i32, i32
  }
}

</mosaic_0001>

<llo_original>
// kernel: tpu_custom_call.1
$region0: #{tpu_custom_call.1}
  #allocation0 [shape = 'u32[]', space=smem, size = 0x4, offset = 0x4, fixed_abs, tag = 'smem constant byte address 0x4 - core index']
  #allocation1 [shape = 'u32[144,128]{1,0:T(1,128)}', space=vmem, size = 0x12000, scoped, tag = 'internal scratch']
  %s0 = inlined_call_operand.hbm [shape: f32[8,896], index: 0, kind: input, shape index: {}]
  %s1 = inlined_call_operand.hbm [shape: bf16[896,512], index: 1, kind: input, shape index: {}]
  %s2 = inlined_call_operand.vmem [shape: f32[1,512], index: 2, kind: input, shape index: {}]
  %s3 = inlined_call_operand.hbm [shape: bf16[512,256], index: 3, kind: input, shape index: {}]
  %s4 = inlined_call_operand.vmem [shape: f32[1,256], index: 4, kind: input, shape index: {}]
  %s5 = inlined_call_operand.hbm [shape: bf16[256,128], index: 5, kind: input, shape index: {}]
  %s6 = inlined_call_operand.vmem [shape: f32[1,128], index: 6, kind: input, shape index: {}]
  %s7 = inlined_call_operand.hbm [shape: bf16[128,128], index: 7, kind: input, shape index: {}]
  %s8 = inlined_call_operand.vmem [shape: f32[1,128], index: 8, kind: input, shape index: {}]
  %s9 = inlined_call_operand.hbm [shape: f32[8,128], index: 9, kind: output, shape index: {}]
  %s10 = sld [smem:[#allocation0]]
  $region66: #{tpu_custom_call.1} parent=0
    _
  %s12 = ssub.s32 1, %s10
  %s13 = scalar_select 0, %s12, %s10
  $region1: #{tpu_custom_call.1} parent=0
    #allocation2 [shape = 'u8[28672]{0}', space=vmem, size = 0x7000, scoped, tag = 'input window, operand 0, single buffered']
    #allocation3 [shape = 's32[1]{0}', space=sflag, size = 0x4, scoped, tag = 'scoped memory for tpu_custom_call.1']
    #allocation4 [shape = 's32[1]{0}', space=sflag, size = 0x4, scoped, tag = 'scoped memory for tpu_custom_call.1']
    #allocation5 [shape = 'u8[917504]{0}', space=vmem, size = 0xe0000, scoped, tag = 'input window, operand 1, single buffered']
    #allocation6 [shape = 's32[1]{0}', space=sflag, size = 0x4, scoped, tag = 'scoped memory for tpu_custom_call.1']
    #allocation7 [shape = 'u8[262144]{0}', space=vmem, size = 0x40000, scoped, tag = 'input window, operand 3, single buffered']
    #allocation8 [shape = 'u8[65536]{0}', space=vmem, size = 0x10000, scoped, tag = 'input window, operand 5, single buffered']
    #allocation9 [shape = 's32[1]{0}', space=sflag, size = 0x4, scoped, tag = 'scoped memory for tpu_custom_call.1']
    #allocation10 [shape = 'u8[32768]{0}', space=vmem, size = 0x8000, scoped, tag = 'input window, operand 7, single buffered']
    #allocation11 [shape = 'u8[4096]{0}', space=vmem, size = 0x1000, scoped, tag = 'output window, operand 0, single buffered']
    %14 = vsyncpa [#allocation3], 0
    %15 = vsyncpa [#allocation6], 0
    %16 = vsyncpa [#allocation9], 0
    %17 = vsyncpa [#allocation4], 0
    // Predicated region
    $region2: #{tpu_custom_call.1} parent=1 // pred_check
      _
    $region3: #{tpu_custom_call.1} parent=1 // pred_check_branch
      %19 = sbr.rel (0) target = $region5
    $region4: #{tpu_custom_call.1} parent=1 // pred_region
      %s21 = ssub.s32 896, 896
      %22 = vsyncadd [#allocation3], %s21
      %s24 = sshll.u32 [#allocation2], 4
      %s25 = int_to_ptr.vmem [resolvable:$true] %s24
      %27 = dma.hbm_to_vmem [thread:$0]  %s0, 896, %s25, [#allocation3]
    $region5: #{tpu_custom_call.1} parent=1 // pred_fallthru
      _
    // Predicated region
    $region6: #{tpu_custom_call.1} parent=1 // pred_check
      _
    $region7: #{tpu_custom_call.1} parent=1 // pred_check_branch
      %29 = sbr.rel (0) target = $region9
    $region8: #{tpu_custom_call.1} parent=1 // pred_region
      %s31 = ssub.s32 28672, 28672
      %32 = vsyncadd [#allocation6], %s31
      %s33 = sshll.u32 [#allocation5], 4
      %s34 = int_to_ptr.vmem [resolvable:$true] %s33
      %39 = dma.hbm_to_vmem [thread:$0]  %s1, 28672, %s34, [#allocation6], 256, 256, 16
    $region9: #{tpu_custom_call.1} parent=1 // pred_fallthru
      _
    // Predicated region
    $region10: #{tpu_custom_call.1} parent=1 // pred_check
      _
    $region11: #{tpu_custom_call.1} parent=1 // pred_check_branch
      %41 = sbr.rel (0) target = $region13
    $region12: #{tpu_custom_call.1} parent=1 // pred_region
      _
    $region13: #{tpu_custom_call.1} parent=1 // pred_fallthru
      _
    // Predicated region
    $region14: #{tpu_custom_call.1} parent=1 // pred_check
      _
    $region15: #{tpu_custom_call.1} parent=1 // pred_check_branch
      %43 = sbr.rel (0) target = $region17
    $region16: #{tpu_custom_call.1} parent=1 // pred_region
      %s45 = ssub.s32 8192, 8192
      %46 = vsyncadd [#allocation6], %s45
      %s47 = sshll.u32 [#allocation7], 4
      %s48 = int_to_ptr.vmem [resolvable:$true] %s47
      %53 = dma.hbm_to_vmem [thread:$0]  %s3, 8192, %s48, [#allocation6], 128, 128, 8
    $region17: #{tpu_custom_call.1} parent=1 // pred_fallthru
      _
    // Predicated region
    $region18: #{tpu_custom_call.1} parent=1 // pred_check
      _
    $region19: #{tpu_custom_call.1} parent=1 // pred_check_branch
      %55 = sbr.rel (0) target = $region21
    $region20: #{tpu_custom_call.1} parent=1 // pred_region
      _
    $region21: #{tpu_custom_call.1} parent=1 // pred_fallthru
      _
    // Predicated region
    $region22: #{tpu_custom_call.1} parent=1 // pred_check
      _
    $region23: #{tpu_custom_call.1} parent=1 // pred_check_branch
      %57 = sbr.rel (0) target = $region25
    $region24: #{tpu_custom_call.1} parent=1 // pred_region
      %s59 = ssub.s32 2048, 2048
      %60 = vsyncadd [#allocation9], %s59
      %s61 = sshll.u32 [#allocation8], 4
      %s62 = int_to_ptr.vmem [resolvable:$true] %s61
      %67 = dma.hbm_to_vmem [thread:$0]  %s5, 2048, %s62, [#allocation9], 64, 64, 4
    $region25: #{tpu_custom_call.1} parent=1 // pred_fallthru
      _
    // Predicated region
    $region26: #{tpu_custom_call.1} parent=1 // pred_check
      _
    $region27: #{tpu_custom_call.1} parent=1 // pred_check_branch
      %69 = sbr.rel (0) target = $region29
    $region28: #{tpu_custom_call.1} parent=1 // pred_region
      _
    $region29: #{tpu_custom_call.1} parent=1 // pred_fallthru
      _
    // Predicated region
    $region30: #{tpu_custom_call.1} parent=1 // pred_check
      _
    $region31: #{tpu_custom_call.1} parent=1 // pred_check_branch
      %71 = sbr.rel (0) target = $region33
    $region32: #{tpu_custom_call.1} parent=1 // pred_region
      %s73 = ssub.s32 1024, 1024
      %74 = vsyncadd [#allocation9], %s73
      %s75 = sshll.u32 [#allocation10], 4
      %s76 = int_to_ptr.vmem [resolvable:$true] %s75
      %81 = dma.hbm_to_vmem [thread:$0]  %s7, 1024, %s76, [#allocation9], 64, 64, 4
    $region33: #{tpu_custom_call.1} parent=1 // pred_fallthru
      _
    // Predicated region
    $region34: #{tpu_custom_call.1} parent=1 // pred_check
      _
    $region35: #{tpu_custom_call.1} parent=1 // pred_check_branch
      %83 = sbr.rel (0) target = $region37
    $region36: #{tpu_custom_call.1} parent=1 // pred_region
      _
    $region37: #{tpu_custom_call.1} parent=1 // pred_fallthru
      _
    // Predicated region
    $region38: #{tpu_custom_call.1} parent=1 // pred_check
      _
    $region39: #{tpu_custom_call.1} parent=1 // pred_check_branch
      %85 = sbr.rel (0) target = $region41
    $region40: #{tpu_custom_call.1} parent=1 // pred_region
      %86 = dma.done [#allocation3], 896
    $region41: #{tpu_custom_call.1} parent=1 // pred_fallthru
      _
    // Predicated region
    $region42: #{tpu_custom_call.1} parent=1 // pred_check
      _
    $region43: #{tpu_custom_call.1} parent=1 // pred_check_branch
      %88 = sbr.rel (0) target = $region45
    $region44: #{tpu_custom_call.1} parent=1 // pred_region
      %89 = dma.done [#allocation6], 28672
    $region45: #{tpu_custom_call.1} parent=1 // pred_fallthru
      _
    // Predicated region
    $region46: #{tpu_custom_call.1} parent=1 // pred_check
      _
    $region47: #{tpu_custom_call.1} parent=1 // pred_check_branch
      %91 = sbr.rel (0) target = $region49
    $region48: #{tpu_custom_call.1} parent=1 // pred_region
      %92 = dma.done [#allocation6], 8192
    $region49: #{tpu_custom_call.1} parent=1 // pred_fallthru
      _
    // Predicated region
    $region50: #{tpu_custom_call.1} parent=1 // pred_check
      _
    $region51: #{tpu_custom_call.1} parent=1 // pred_check_branch
      %94 = sbr.rel (0) target = $region53
    $region52: #{tpu_custom_call.1} parent=1 // pred_region
      %95 = dma.done [#allocation9], 2048
    $region53: #{tpu_custom_call.1} parent=1 // pred_fallthru
      _
    // Predicated region
    $region54: #{tpu_custom_call.1} parent=1 // pred_check
      _
    $region55: #{tpu_custom_call.1} parent=1 // pred_check_branch
      %97 = sbr.rel (0) target = $region57
    $region56: #{tpu_custom_call.1} parent=1 // pred_region
      %98 = dma.done [#allocation9], 1024
    $region57: #{tpu_custom_call.1} parent=1 // pred_fallthru
      _
    %v100 = vld [vmem:[#allocation2] sm:$0xff]
    %v101 = vld [vmem:[#allocation2 + $0x8] sm:$0xff]
    %v102 = vld [vmem:[#allocation2 + $0x10] sm:$0xff]
    %v103 = vld [vmem:[#allocation2 + $0x18] sm:$0xff]
    %v104 = vld [vmem:[#allocation2 + $0x20] sm:$0xff]
    %v105 = vld [vmem:[#allocation2 + $0x28] sm:$0xff]
    %v106 = vld [vmem:[#allocation2 + $0x30] sm:$0xff]
    %v107 = vpack.c.bf16 %v100, %v100
    %v108 = vpack.c.bf16 %v101, %v101
    %v109 = vpack.c.bf16 %v102, %v102
    %v110 = vpack.c.bf16 %v103, %v103
    %v111 = vpack.c.bf16 %v104, %v104
    %v112 = vpack.c.bf16 %v105, %v105
    %v113 = vpack.c.bf16 %v106, %v106
    %v114 = vld [vmem:[#allocation5] sm:$0xff]
    %v115 = vld [vmem:[#allocation5 + $0x8] sm:$0xff]
    %v116 = vld [vmem:[#allocation5 + $0x10] sm:$0xff]
    %v117 = vld [vmem:[#allocation5 + $0x18] sm:$0xff]
    %v118 = vld [vmem:[#allocation5 + $0x20] sm:$0xff]
    %v119 = vld [vmem:[#allocation5 + $0x28] sm:$0xff]
    %v120 = vld [vmem:[#allocation5 + $0x30] sm:$0xff]
    %v121 = vld [vmem:[#allocation5 + $0x38] sm:$0xff]
    %v122 = vld [vmem:[#allocation5 + $0x40] sm:$0xff]
    %v123 = vld [vmem:[#allocation5 + $0x48] sm:$0xff]
    %v124 = vld [vmem:[#allocation5 + $0x50] sm:$0xff]
    %v125 = vld [vmem:[#allocation5 + $0x58] sm:$0xff]
    %v126 = vld [vmem:[#allocation5 + $0x60] sm:$0xff]
    %v127 = vld [vmem:[#allocation5 + $0x68] sm:$0xff]
    %v128 = vld [vmem:[#allocation5 + $0x70] sm:$0xff]
    %v129 = vld [vmem:[#allocation5 + $0x78] sm:$0xff]
    %v130 = vld [vmem:[#allocation5 + $0x80] sm:$0xff]
    %v131 = vld [vmem:[#allocation5 + $0x88] sm:$0xff]
    %v132 = vld [vmem:[#allocation5 + $0x90] sm:$0xff]
    %v133 = vld [vmem:[#allocation5 + $0x98] sm:$0xff]
    %v134 = vld [vmem:[#allocation5 + $0xa0] sm:$0xff]
    %v135 = vld [vmem:[#allocation5 + $0xa8] sm:$0xff]
    %v136 = vld [vmem:[#allocation5 + $0xb0] sm:$0xff]
    %v137 = vld [vmem:[#allocation5 + $0xb8] sm:$0xff]
    %v138 = vld [vmem:[#allocation5 + $0xc0] sm:$0xff]
    %v139 = vld [vmem:[#allocation5 + $0xc8] sm:$0xff]
    %v140 = vld [vmem:[#allocation5 + $0xd0] sm:$0xff]
    %v141 = vld [vmem:[#allocation5 + $0xd8] sm:$0xff]
    %v142 = vld [vmem:[#allocation5 + $0xe0] sm:$0xff]
    %v143 = vld [vmem:[#allocation5 + $0xe8] sm:$0xff]
    %v144 = vld [vmem:[#allocation5 + $0xf0] sm:$0xff]
    %v145 = vld [vmem:[#allocation5 + $0xf8] sm:$0xff]
    %v146 = vld [vmem:[#allocation5 + $0x100] sm:$0xff]
    %v147 = vld [vmem:[#allocation5 + $0x108] sm:$0xff]
    %v148 = vld [vmem:[#allocation5 + $0x110] sm:$0xff]
    %v149 = vld [vmem:[#allocation5 + $0x118] sm:$0xff]
    %v150 = vld [vmem:[#allocation5 + $0x120] sm:$0xff]
    %v151 = vld [vmem:[#allocation5 + $0x128] sm:$0xff]
    %v152 = vld [vmem:[#allocation5 + $0x130] sm:$0xff]
    %v153 = vld [vmem:[#allocation5 + $0x138] sm:$0xff]
    %v154 = vld [vmem:[#allocation5 + $0x140] sm:$0xff]
    %v155 = vld [vmem:[#allocation5 + $0x148] sm:$0xff]
    %v156 = vld [vmem:[#allocation5 + $0x150] sm:$0xff]
    %v157 = vld [vmem:[#allocation5 + $0x158] sm:$0xff]
    %v158 = vld [vmem:[#allocation5 + $0x160] sm:$0xff]
    %v159 = vld [vmem:[#allocation5 + $0x168] sm:$0xff]
    %v160 = vld [vmem:[#allocation5 + $0x170] sm:$0xff]
    %v161 = vld [vmem:[#allocation5 + $0x178] sm:$0xff]
    %v162 = vld [vmem:[#allocation5 + $0x180] sm:$0xff]
    %v163 = vld [vmem:[#allocation5 + $0x188] sm:$0xff]
    %v164 = vld [vmem:[#allocation5 + $0x190] sm:$0xff]
    %v165 = vld [vmem:[#allocation5 + $0x198] sm:$0xff]
    %v166 = vld [vmem:[#allocation5 + $0x1a0] sm:$0xff]
    %v167 = vld [vmem:[#allocation5 + $0x1a8] sm:$0xff]
    %v168 = vld [vmem:[#allocation5 + $0x1b0] sm:$0xff]
    %v169 = vld [vmem:[#allocation5 + $0x1b8] sm:$0xff]
    %v170 = vld [vmem:[#allocation5 + $0x1c0] sm:$0xff]
    %v171 = vld [vmem:[#allocation5 + $0x1c8] sm:$0xff]
    %v172 = vld [vmem:[#allocation5 + $0x1d0] sm:$0xff]
    %v173 = vld [vmem:[#allocation5 + $0x1d8] sm:$0xff]
    %v174 = vld [vmem:[#allocation5 + $0x1e0] sm:$0xff]
    %v175 = vld [vmem:[#allocation5 + $0x1e8] sm:$0xff]
    %v176 = vld [vmem:[#allocation5 + $0x1f0] sm:$0xff]
    %v177 = vld [vmem:[#allocation5 + $0x1f8] sm:$0xff]
    %v178 = vld [vmem:[#allocation5 + $0x200] sm:$0xff]
    %v179 = vld [vmem:[#allocation5 + $0x208] sm:$0xff]
    %v180 = vld [vmem:[#allocation5 + $0x210] sm:$0xff]
    %v181 = vld [vmem:[#allocation5 + $0x218] sm:$0xff]
    %v182 = vld [vmem:[#allocation5 + $0x220] sm:$0xff]
    %v183 = vld [vmem:[#allocation5 + $0x228] sm:$0xff]
    %v184 = vld [vmem:[#allocation5 + $0x230] sm:$0xff]
    %v185 = vld [vmem:[#allocation5 + $0x238] sm:$0xff]
    %v186 = vld [vmem:[#allocation5 + $0x240] sm:$0xff]
    %v187 = vld [vmem:[#allocation5 + $0x248] sm:$0xff]
    %v188 = vld [vmem:[#allocation5 + $0x250] sm:$0xff]
    %v189 = vld [vmem:[#allocation5 + $0x258] sm:$0xff]
    %v190 = vld [vmem:[#allocation5 + $0x260] sm:$0xff]
    %v191 = vld [vmem:[#allocation5 + $0x268] sm:$0xff]
    %v192 = vld [vmem:[#allocation5 + $0x270] sm:$0xff]
    %v193 = vld [vmem:[#allocation5 + $0x278] sm:$0xff]
    %v194 = vld [vmem:[#allocation5 + $0x280] sm:$0xff]
    %v195 = vld [vmem:[#allocation5 + $0x288] sm:$0xff]
    %v196 = vld [vmem:[#allocation5 + $0x290] sm:$0xff]
    %v197 = vld [vmem:[#allocation5 + $0x298] sm:$0xff]
    %v198 = vld [vmem:[#allocation5 + $0x2a0] sm:$0xff]
    %v199 = vld [vmem:[#allocation5 + $0x2a8] sm:$0xff]
    %v200 = vld [vmem:[#allocation5 + $0x2b0] sm:$0xff]
    %v201 = vld [vmem:[#allocation5 + $0x2b8] sm:$0xff]
    %v202 = vld [vmem:[#allocation5 + $0x2c0] sm:$0xff]
    %v203 = vld [vmem:[#allocation5 + $0x2c8] sm:$0xff]
    %v204 = vld [vmem:[#allocation5 + $0x2d0] sm:$0xff]
    %v205 = vld [vmem:[#allocation5 + $0x2d8] sm:$0xff]
    %v206 = vld [vmem:[#allocation5 + $0x2e0] sm:$0xff]
    %v207 = vld [vmem:[#allocation5 + $0x2e8] sm:$0xff]
    %v208 = vld [vmem:[#allocation5 + $0x2f0] sm:$0xff]
    %v209 = vld [vmem:[#allocation5 + $0x2f8] sm:$0xff]
    %v210 = vld [vmem:[#allocation5 + $0x300] sm:$0xff]
    %v211 = vld [vmem:[#allocation5 + $0x308] sm:$0xff]
    %v212 = vld [vmem:[#allocation5 + $0x310] sm:$0xff]
    %v213 = vld [vmem:[#allocation5 + $0x318] sm:$0xff]
    %v214 = vld [vmem:[#allocation5 + $0x320] sm:$0xff]
    %v215 = vld [vmem:[#allocation5 + $0x328] sm:$0xff]
    %v216 = vld [vmem:[#allocation5 + $0x330] sm:$0xff]
    %v217 = vld [vmem:[#allocation5 + $0x338] sm:$0xff]
    %v218 = vld [vmem:[#allocation5 + $0x340] sm:$0xff]
    %v219 = vld [vmem:[#allocation5 + $0x348] sm:$0xff]
    %v220 = vld [vmem:[#allocation5 + $0x350] sm:$0xff]
    %v221 = vld [vmem:[#allocation5 + $0x358] sm:$0xff]
    %v222 = vld [vmem:[#allocation5 + $0x360] sm:$0xff]
    %v223 = vld [vmem:[#allocation5 + $0x368] sm:$0xff]
    %v224 = vld [vmem:[#allocation5 + $0x370] sm:$0xff]
    %v225 = vld [vmem:[#allocation5 + $0x378] sm:$0xff]
    %v226 = vld [vmem:[#allocation5 + $0x380] sm:$0xff]
    %v227 = vld [vmem:[#allocation5 + $0x388] sm:$0xff]
    %v228 = vld [vmem:[#allocation5 + $0x390] sm:$0xff]
    %v229 = vld [vmem:[#allocation5 + $0x398] sm:$0xff]
    %v230 = vld [vmem:[#allocation5 + $0x3a0] sm:$0xff]
    %v231 = vld [vmem:[#allocation5 + $0x3a8] sm:$0xff]
    %v232 = vld [vmem:[#allocation5 + $0x3b0] sm:$0xff]
    %v233 = vld [vmem:[#allocation5 + $0x3b8] sm:$0xff]
    %v234 = vld [vmem:[#allocation5 + $0x3c0] sm:$0xff]
    %v235 = vld [vmem:[#allocation5 + $0x3c8] sm:$0xff]
    %v236 = vld [vmem:[#allocation5 + $0x3d0] sm:$0xff]
    %v237 = vld [vmem:[#allocation5 + $0x3d8] sm:$0xff]
    %v238 = vld [vmem:[#allocation5 + $0x3e0] sm:$0xff]
    %v239 = vld [vmem:[#allocation5 + $0x3e8] sm:$0xff]
    %v240 = vld [vmem:[#allocation5 + $0x3f0] sm:$0xff]
    %v241 = vld [vmem:[#allocation5 + $0x3f8] sm:$0xff]
    %v242 = vld [vmem:[#allocation5 + $0x400] sm:$0xff]
    %v243 = vld [vmem:[#allocation5 + $0x408] sm:$0xff]
    %v244 = vld [vmem:[#allocation5 + $0x410] sm:$0xff]
    %v245 = vld [vmem:[#allocation5 + $0x418] sm:$0xff]
    %v246 = vld [vmem:[#allocation5 + $0x420] sm:$0xff]
    %v247 = vld [vmem:[#allocation5 + $0x428] sm:$0xff]
    %v248 = vld [vmem:[#allocation5 + $0x430] sm:$0xff]
    %v249 = vld [vmem:[#allocation5 + $0x438] sm:$0xff]
    %v250 = vld [vmem:[#allocation5 + $0x440] sm:$0xff]
    %v251 = vld [vmem:[#allocation5 + $0x448] sm:$0xff]
    %v252 = vld [vmem:[#allocation5 + $0x450] sm:$0xff]
    %v253 = vld [vmem:[#allocation5 + $0x458] sm:$0xff]
    %v254 = vld [vmem:[#allocation5 + $0x460] sm:$0xff]
    %v255 = vld [vmem:[#allocation5 + $0x468] sm:$0xff]
    %v256 = vld [vmem:[#allocation5 + $0x470] sm:$0xff]
    %v257 = vld [vmem:[#allocation5 + $0x478] sm:$0xff]
    %v258 = vld [vmem:[#allocation5 + $0x480] sm:$0xff]
    %v259 = vld [vmem:[#allocation5 + $0x488] sm:$0xff]
    %v260 = vld [vmem:[#allocation5 + $0x490] sm:$0xff]
    %v261 = vld [vmem:[#allocation5 + $0x498] sm:$0xff]
    %v262 = vld [vmem:[#allocation5 + $0x4a0] sm:$0xff]
    %v263 = vld [vmem:[#allocation5 + $0x4a8] sm:$0xff]
    %v264 = vld [vmem:[#allocation5 + $0x4b0] sm:$0xff]
    %v265 = vld [vmem:[#allocation5 + $0x4b8] sm:$0xff]
    %v266 = vld [vmem:[#allocation5 + $0x4c0] sm:$0xff]
    %v267 = vld [vmem:[#allocation5 + $0x4c8] sm:$0xff]
    %v268 = vld [vmem:[#allocation5 + $0x4d0] sm:$0xff]
    %v269 = vld [vmem:[#allocation5 + $0x4d8] sm:$0xff]
    %v270 = vld [vmem:[#allocation5 + $0x4e0] sm:$0xff]
    %v271 = vld [vmem:[#allocation5 + $0x4e8] sm:$0xff]
    %v272 = vld [vmem:[#allocation5 + $0x4f0] sm:$0xff]
    %v273 = vld [vmem:[#allocation5 + $0x4f8] sm:$0xff]
    %v274 = vld [vmem:[#allocation5 + $0x500] sm:$0xff]
    %v275 = vld [vmem:[#allocation5 + $0x508] sm:$0xff]
    %v276 = vld [vmem:[#allocation5 + $0x510] sm:$0xff]
    %v277 = vld [vmem:[#allocation5 + $0x518] sm:$0xff]
    %v278 = vld [vmem:[#allocation5 + $0x520] sm:$0xff]
    %v279 = vld [vmem:[#allocation5 + $0x528] sm:$0xff]
    %v280 = vld [vmem:[#allocation5 + $0x530] sm:$0xff]
    %v281 = vld [vmem:[#allocation5 + $0x538] sm:$0xff]
    %v282 = vld [vmem:[#allocation5 + $0x540] sm:$0xff]
    %v283 = vld [vmem:[#allocation5 + $0x548] sm:$0xff]
    %v284 = vld [vmem:[#allocation5 + $0x550] sm:$0xff]
    %v285 = vld [vmem:[#allocation5 + $0x558] sm:$0xff]
    %v286 = vld [vmem:[#allocation5 + $0x560] sm:$0xff]
    %v287 = vld [vmem:[#allocation5 + $0x568] sm:$0xff]
    %v288 = vld [vmem:[#allocation5 + $0x570] sm:$0xff]
    %v289 = vld [vmem:[#allocation5 + $0x578] sm:$0xff]
    %v290 = vld [vmem:[#allocation5 + $0x580] sm:$0xff]
    %v291 = vld [vmem:[#allocation5 + $0x588] sm:$0xff]
    %v292 = vld [vmem:[#allocation5 + $0x590] sm:$0xff]
    %v293 = vld [vmem:[#allocation5 + $0x598] sm:$0xff]
    %v294 = vld [vmem:[#allocation5 + $0x5a0] sm:$0xff]
    %v295 = vld [vmem:[#allocation5 + $0x5a8] sm:$0xff]
    %v296 = vld [vmem:[#allocation5 + $0x5b0] sm:$0xff]
    %v297 = vld [vmem:[#allocation5 + $0x5b8] sm:$0xff]
    %v298 = vld [vmem:[#allocation5 + $0x5c0] sm:$0xff]
    %v299 = vld [vmem:[#allocation5 + $0x5c8] sm:$0xff]
    %v300 = vld [vmem:[#allocation5 + $0x5d0] sm:$0xff]
    %v301 = vld [vmem:[#allocation5 + $0x5d8] sm:$0xff]
    %v302 = vld [vmem:[#allocation5 + $0x5e0] sm:$0xff]
    %v303 = vld [vmem:[#allocation5 + $0x5e8] sm:$0xff]
    %v304 = vld [vmem:[#allocation5 + $0x5f0] sm:$0xff]
    %v305 = vld [vmem:[#allocation5 + $0x5f8] sm:$0xff]
    %v306 = vld [vmem:[#allocation5 + $0x600] sm:$0xff]
    %v307 = vld [vmem:[#allocation5 + $0x608] sm:$0xff]
    %v308 = vld [vmem:[#allocation5 + $0x610] sm:$0xff]
    %v309 = vld [vmem:[#allocation5 + $0x618] sm:$0xff]
    %v310 = vld [vmem:[#allocation5 + $0x620] sm:$0xff]
    %v311 = vld [vmem:[#allocation5 + $0x628] sm:$0xff]
    %v312 = vld [vmem:[#allocation5 + $0x630] sm:$0xff]
    %v313 = vld [vmem:[#allocation5 + $0x638] sm:$0xff]
    %v314 = vld [vmem:[#allocation5 + $0x640] sm:$0xff]
    %v315 = vld [vmem:[#allocation5 + $0x648] sm:$0xff]
    %v316 = vld [vmem:[#allocation5 + $0x650] sm:$0xff]
    %v317 = vld [vmem:[#allocation5 + $0x658] sm:$0xff]
    %v318 = vld [vmem:[#allocation5 + $0x660] sm:$0xff]
    %v319 = vld [vmem:[#allocation5 + $0x668] sm:$0xff]
    %v320 = vld [vmem:[#allocation5 + $0x670] sm:$0xff]
    %v321 = vld [vmem:[#allocation5 + $0x678] sm:$0xff]
    %v322 = vld [vmem:[#allocation5 + $0x680] sm:$0xff]
    %v323 = vld [vmem:[#allocation5 + $0x688] sm:$0xff]
    %v324 = vld [vmem:[#allocation5 + $0x690] sm:$0xff]
    %v325 = vld [vmem:[#allocation5 + $0x698] sm:$0xff]
    %v326 = vld [vmem:[#allocation5 + $0x6a0] sm:$0xff]
    %v327 = vld [vmem:[#allocation5 + $0x6a8] sm:$0xff]
    %v328 = vld [vmem:[#allocation5 + $0x6b0] sm:$0xff]
    %v329 = vld [vmem:[#allocation5 + $0x6b8] sm:$0xff]
    %v330 = vld [vmem:[#allocation5 + $0x6c0] sm:$0xff]
    %v331 = vld [vmem:[#allocation5 + $0x6c8] sm:$0xff]
    %v332 = vld [vmem:[#allocation5 + $0x6d0] sm:$0xff]
    %v333 = vld [vmem:[#allocation5 + $0x6d8] sm:$0xff]
    %v334 = vld [vmem:[#allocation5 + $0x6e0] sm:$0xff]
    %v335 = vld [vmem:[#allocation5 + $0x6e8] sm:$0xff]
    %v336 = vld [vmem:[#allocation5 + $0x6f0] sm:$0xff]
    %v337 = vld [vmem:[#allocation5 + $0x6f8] sm:$0xff]
    %v338 = vld [vmem:[%s2] sm:$0xf]
    %v340 = vlaneseq
    %v341 = vshrl.u32 %v340, 7
    %v342 = vsub.s32 0, %v341
    %v343 = vrot.slane %v338, %v342
    %v344 = vlaneseq
    %v345 = vshrl.u32 %v344, 7
    %v346 = vsub.s32 1, %v345
    %v347 = vrot.slane %v338, %v346
    %v348 = vlaneseq
    %v349 = vshrl.u32 %v348, 7
    %v350 = vsub.s32 2, %v349
    %v351 = vrot.slane %v338, %v350
    %v352 = vlaneseq
    %v353 = vshrl.u32 %v352, 7
    %v354 = vsub.s32 3, %v353
    %v355 = vrot.slane %v338, %v354
    %v584 = vunpack.c.l.b16 %v114
    %v585 = vunpack.c.h.b16 %v114
    %v586 = vunpack.c.l.b16 %v115
    %v587 = vunpack.c.h.b16 %v115
    %v588 = vunpack.c.l.b16 %v116
    %v589 = vunpack.c.h.b16 %v116
    %v590 = vunpack.c.l.b16 %v117
    %v591 = vunpack.c.h.b16 %v117
    %v592 = vunpack.c.l.b16 %v118
    %v593 = vunpack.c.h.b16 %v118
    %v594 = vunpack.c.l.b16 %v119
    %v595 = vunpack.c.h.b16 %v119
    %v596 = vunpack.c.l.b16 %v120
    %v597 = vunpack.c.h.b16 %v120
    %v598 = vunpack.c.l.b16 %v121
    %v599 = vunpack.c.h.b16 %v121
    %v600 = vunpack.c.l.b16 %v122
    %v601 = vunpack.c.h.b16 %v122
    %v602 = vunpack.c.l.b16 %v123
    %v603 = vunpack.c.h.b16 %v123
    %v604 = vunpack.c.l.b16 %v124
    %v605 = vunpack.c.h.b16 %v124
    %v606 = vunpack.c.l.b16 %v125
    %v607 = vunpack.c.h.b16 %v125
    %v608 = vunpack.c.l.b16 %v126
    %v609 = vunpack.c.h.b16 %v126
    %v610 = vunpack.c.l.b16 %v127
    %v611 = vunpack.c.h.b16 %v127
    %v612 = vunpack.c.l.b16 %v128
    %v613 = vunpack.c.h.b16 %v128
    %v614 = vunpack.c.l.b16 %v129
    %v615 = vunpack.c.h.b16 %v129
    %v616 = vunpack.c.l.b16 %v130
    %v617 = vunpack.c.h.b16 %v130
    %v618 = vunpack.c.l.b16 %v131
    %v619 = vunpack.c.h.b16 %v131
    %v620 = vunpack.c.l.b16 %v132
    %v621 = vunpack.c.h.b16 %v132
    %v622 = vunpack.c.l.b16 %v133
    %v623 = vunpack.c.h.b16 %v133
    %v624 = vunpack.c.l.b16 %v134
    %v625 = vunpack.c.h.b16 %v134
    %v626 = vunpack.c.l.b16 %v135
    %v627 = vunpack.c.h.b16 %v135
    %v628 = vunpack.c.l.b16 %v136
    %v629 = vunpack.c.h.b16 %v136
    %v630 = vunpack.c.l.b16 %v137
    %v631 = vunpack.c.h.b16 %v137
    %v632 = vunpack.c.l.b16 %v138
    %v633 = vunpack.c.h.b16 %v138
    %v634 = vunpack.c.l.b16 %v139
    %v635 = vunpack.c.h.b16 %v139
    %v636 = vunpack.c.l.b16 %v140
    %v637 = vunpack.c.h.b16 %v140
    %v638 = vunpack.c.l.b16 %v141
    %v639 = vunpack.c.h.b16 %v141
    %v640 = vunpack.c.l.b16 %v142
    %v641 = vunpack.c.h.b16 %v142
    %v642 = vunpack.c.l.b16 %v143
    %v643 = vunpack.c.h.b16 %v143
    %v644 = vunpack.c.l.b16 %v144
    %v645 = vunpack.c.h.b16 %v144
    %v646 = vunpack.c.l.b16 %v145
    %v647 = vunpack.c.h.b16 %v145
    %v648 = vunpack.c.l.b16 %v146
    %v649 = vunpack.c.h.b16 %v146
    %v650 = vunpack.c.l.b16 %v147
    %v651 = vunpack.c.h.b16 %v147
    %v652 = vunpack.c.l.b16 %v148
    %v653 = vunpack.c.h.b16 %v148
    %v654 = vunpack.c.l.b16 %v149
    %v655 = vunpack.c.h.b16 %v149
    %v656 = vunpack.c.l.b16 %v150
    %v657 = vunpack.c.h.b16 %v150
    %v658 = vunpack.c.l.b16 %v151
    %v659 = vunpack.c.h.b16 %v151
    %v660 = vunpack.c.l.b16 %v152
    %v661 = vunpack.c.h.b16 %v152
    %v662 = vunpack.c.l.b16 %v153
    %v663 = vunpack.c.h.b16 %v153
    %v664 = vunpack.c.l.b16 %v154
    %v665 = vunpack.c.h.b16 %v154
    %v666 = vunpack.c.l.b16 %v155
    %v667 = vunpack.c.h.b16 %v155
    %v668 = vunpack.c.l.b16 %v156
    %v669 = vunpack.c.h.b16 %v156
    %v670 = vunpack.c.l.b16 %v157
    %v671 = vunpack.c.h.b16 %v157
    %v672 = vunpack.c.l.b16 %v158
    %v673 = vunpack.c.h.b16 %v158
    %v674 = vunpack.c.l.b16 %v159
    %v675 = vunpack.c.h.b16 %v159
    %v676 = vunpack.c.l.b16 %v160
    %v677 = vunpack.c.h.b16 %v160
    %v678 = vunpack.c.l.b16 %v161
    %v679 = vunpack.c.h.b16 %v161
    %v680 = vunpack.c.l.b16 %v162
    %v681 = vunpack.c.h.b16 %v162
    %v682 = vunpack.c.l.b16 %v163
    %v683 = vunpack.c.h.b16 %v163
    %v684 = vunpack.c.l.b16 %v164
    %v685 = vunpack.c.h.b16 %v164
    %v686 = vunpack.c.l.b16 %v165
    %v687 = vunpack.c.h.b16 %v165
    %v688 = vunpack.c.l.b16 %v166
    %v689 = vunpack.c.h.b16 %v166
    %v690 = vunpack.c.l.b16 %v167
    %v691 = vunpack.c.h.b16 %v167
    %v692 = vunpack.c.l.b16 %v168
    %v693 = vunpack.c.h.b16 %v168
    %v694 = vunpack.c.l.b16 %v169
    %v695 = vunpack.c.h.b16 %v169
    %v696 = vunpack.c.l.b16 %v170
    %v697 = vunpack.c.h.b16 %v170
    %v698 = vunpack.c.l.b16 %v171
    %v699 = vunpack.c.h.b16 %v171
    %v700 = vunpack.c.l.b16 %v172
    %v701 = vunpack.c.h.b16 %v172
    %v702 = vunpack.c.l.b16 %v173
    %v703 = vunpack.c.h.b16 %v173
    %v704 = vunpack.c.l.b16 %v174
    %v705 = vunpack.c.h.b16 %v174
    %v706 = vunpack.c.l.b16 %v175
    %v707 = vunpack.c.h.b16 %v175
    %v708 = vunpack.c.l.b16 %v176
    %v709 = vunpack.c.h.b16 %v176
    %v710 = vunpack.c.l.b16 %v177
    %v711 = vunpack.c.h.b16 %v177
    %v712 = vunpack.c.l.b16 %v178
    %v713 = vunpack.c.h.b16 %v178
    %v714 = vunpack.c.l.b16 %v179
    %v715 = vunpack.c.h.b16 %v179
    %v716 = vunpack.c.l.b16 %v180
    %v717 = vunpack.c.h.b16 %v180
    %v718 = vunpack.c.l.b16 %v181
    %v719 = vunpack.c.h.b16 %v181
    %v720 = vunpack.c.l.b16 %v182
    %v721 = vunpack.c.h.b16 %v182
    %v722 = vunpack.c.l.b16 %v183
    %v723 = vunpack.c.h.b16 %v183
    %v724 = vunpack.c.l.b16 %v184
    %v725 = vunpack.c.h.b16 %v184
    %v726 = vunpack.c.l.b16 %v185
    %v727 = vunpack.c.h.b16 %v185
    %v728 = vunpack.c.l.b16 %v186
    %v729 = vunpack.c.h.b16 %v186
    %v730 = vunpack.c.l.b16 %v187
    %v731 = vunpack.c.h.b16 %v187
    %v732 = vunpack.c.l.b16 %v188
    %v733 = vunpack.c.h.b16 %v188
    %v734 = vunpack.c.l.b16 %v189
    %v735 = vunpack.c.h.b16 %v189
    %v736 = vunpack.c.l.b16 %v190
    %v737 = vunpack.c.h.b16 %v190
    %v738 = vunpack.c.l.b16 %v191
    %v739 = vunpack.c.h.b16 %v191
    %v740 = vunpack.c.l.b16 %v192
    %v741 = vunpack.c.h.b16 %v192
    %v742 = vunpack.c.l.b16 %v193
    %v743 = vunpack.c.h.b16 %v193
    %v744 = vunpack.c.l.b16 %v194
    %v745 = vunpack.c.h.b16 %v194
    %v746 = vunpack.c.l.b16 %v195
    %v747 = vunpack.c.h.b16 %v195
    %v748 = vunpack.c.l.b16 %v196
    %v749 = vunpack.c.h.b16 %v196
    %v750 = vunpack.c.l.b16 %v197
    %v751 = vunpack.c.h.b16 %v197
    %v752 = vunpack.c.l.b16 %v198
    %v753 = vunpack.c.h.b16 %v198
    %v754 = vunpack.c.l.b16 %v199
    %v755 = vunpack.c.h.b16 %v199
    %v756 = vunpack.c.l.b16 %v200
    %v757 = vunpack.c.h.b16 %v200
    %v758 = vunpack.c.l.b16 %v201
    %v759 = vunpack.c.h.b16 %v201
    %v760 = vunpack.c.l.b16 %v202
    %v761 = vunpack.c.h.b16 %v202
    %v762 = vunpack.c.l.b16 %v203
    %v763 = vunpack.c.h.b16 %v203
    %v764 = vunpack.c.l.b16 %v204
    %v765 = vunpack.c.h.b16 %v204
    %v766 = vunpack.c.l.b16 %v205
    %v767 = vunpack.c.h.b16 %v205
    %v768 = vunpack.c.l.b16 %v206
    %v769 = vunpack.c.h.b16 %v206
    %v770 = vunpack.c.l.b16 %v207
    %v771 = vunpack.c.h.b16 %v207
    %v772 = vunpack.c.l.b16 %v208
    %v773 = vunpack.c.h.b16 %v208
    %v774 = vunpack.c.l.b16 %v209
    %v775 = vunpack.c.h.b16 %v209
    %v776 = vunpack.c.l.b16 %v210
    %v777 = vunpack.c.h.b16 %v210
    %v778 = vunpack.c.l.b16 %v211
    %v779 = vunpack.c.h.b16 %v211
    %v780 = vunpack.c.l.b16 %v212
    %v781 = vunpack.c.h.b16 %v212
    %v782 = vunpack.c.l.b16 %v213
    %v783 = vunpack.c.h.b16 %v213
    %v784 = vunpack.c.l.b16 %v214
    %v785 = vunpack.c.h.b16 %v214
    %v786 = vunpack.c.l.b16 %v215
    %v787 = vunpack.c.h.b16 %v215
    %v788 = vunpack.c.l.b16 %v216
    %v789 = vunpack.c.h.b16 %v216
    %v790 = vunpack.c.l.b16 %v217
    %v791 = vunpack.c.h.b16 %v217
    %v792 = vunpack.c.l.b16 %v218
    %v793 = vunpack.c.h.b16 %v218
    %v794 = vunpack.c.l.b16 %v219
    %v795 = vunpack.c.h.b16 %v219
    %v796 = vunpack.c.l.b16 %v220
    %v797 = vunpack.c.h.b16 %v220
    %v798 = vunpack.c.l.b16 %v221
    %v799 = vunpack.c.h.b16 %v221
    %v800 = vunpack.c.l.b16 %v222
    %v801 = vunpack.c.h.b16 %v222
    %v802 = vunpack.c.l.b16 %v223
    %v803 = vunpack.c.h.b16 %v223
    %v804 = vunpack.c.l.b16 %v224
    %v805 = vunpack.c.h.b16 %v224
    %v806 = vunpack.c.l.b16 %v225
    %v807 = vunpack.c.h.b16 %v225
    %v808 = vunpack.c.l.b16 %v226
    %v809 = vunpack.c.h.b16 %v226
    %v810 = vunpack.c.l.b16 %v227
    %v811 = vunpack.c.h.b16 %v227
    %v812 = vunpack.c.l.b16 %v228
    %v813 = vunpack.c.h.b16 %v228
    %v814 = vunpack.c.l.b16 %v229
    %v815 = vunpack.c.h.b16 %v229
    %v816 = vunpack.c.l.b16 %v230
    %v817 = vunpack.c.h.b16 %v230
    %v818 = vunpack.c.l.b16 %v231
    %v819 = vunpack.c.h.b16 %v231
    %v820 = vunpack.c.l.b16 %v232
    %v821 = vunpack.c.h.b16 %v232
    %v822 = vunpack.c.l.b16 %v233
    %v823 = vunpack.c.h.b16 %v233
    %v824 = vunpack.c.l.b16 %v234
    %v825 = vunpack.c.h.b16 %v234
    %v826 = vunpack.c.l.b16 %v235
    %v827 = vunpack.c.h.b16 %v235
    %v828 = vunpack.c.l.b16 %v236
    %v829 = vunpack.c.h.b16 %v236
    %v830 = vunpack.c.l.b16 %v237
    %v831 = vunpack.c.h.b16 %v237
    %v832 = vunpack.c.l.b16 %v238
    %v833 = vunpack.c.h.b16 %v238
    %v834 = vunpack.c.l.b16 %v239
    %v835 = vunpack.c.h.b16 %v239
    %v836 = vunpack.c.l.b16 %v240
    %v837 = vunpack.c.h.b16 %v240
    %v838 = vunpack.c.l.b16 %v241
    %v839 = vunpack.c.h.b16 %v241
    %v840 = vunpack.c.l.b16 %v242
    %v841 = vunpack.c.h.b16 %v242
    %v842 = vunpack.c.l.b16 %v243
    %v843 = vunpack.c.h.b16 %v243
    %v844 = vunpack.c.l.b16 %v244
    %v845 = vunpack.c.h.b16 %v244
    %v846 = vunpack.c.l.b16 %v245
    %v847 = vunpack.c.h.b16 %v245
    %v848 = vunpack.c.l.b16 %v246
    %v849 = vunpack.c.h.b16 %v246
    %v850 = vunpack.c.l.b16 %v247
    %v851 = vunpack.c.h.b16 %v247
    %v852 = vunpack.c.l.b16 %v248
    %v853 = vunpack.c.h.b16 %v248
    %v854 = vunpack.c.l.b16 %v249
    %v855 = vunpack.c.h.b16 %v249
    %v856 = vunpack.c.l.b16 %v250
    %v857 = vunpack.c.h.b16 %v250
    %v858 = vunpack.c.l.b16 %v251
    %v859 = vunpack.c.h.b16 %v251
    %v860 = vunpack.c.l.b16 %v252
    %v861 = vunpack.c.h.b16 %v252
    %v862 = vunpack.c.l.b16 %v253
    %v863 = vunpack.c.h.b16 %v253
    %v864 = vunpack.c.l.b16 %v254
    %v865 = vunpack.c.h.b16 %v254
    %v866 = vunpack.c.l.b16 %v255
    %v867 = vunpack.c.h.b16 %v255
    %v868 = vunpack.c.l.b16 %v256
    %v869 = vunpack.c.h.b16 %v256
    %v870 = vunpack.c.l.b16 %v257
    %v871 = vunpack.c.h.b16 %v257
    %v872 = vunpack.c.l.b16 %v258
    %v873 = vunpack.c.h.b16 %v258
    %v874 = vunpack.c.l.b16 %v259
    %v875 = vunpack.c.h.b16 %v259
    %v876 = vunpack.c.l.b16 %v260
    %v877 = vunpack.c.h.b16 %v260
    %v878 = vunpack.c.l.b16 %v261
    %v879 = vunpack.c.h.b16 %v261
    %v880 = vunpack.c.l.b16 %v262
    %v881 = vunpack.c.h.b16 %v262
    %v882 = vunpack.c.l.b16 %v263
    %v883 = vunpack.c.h.b16 %v263
    %v884 = vunpack.c.l.b16 %v264
    %v885 = vunpack.c.h.b16 %v264
    %v886 = vunpack.c.l.b16 %v265
    %v887 = vunpack.c.h.b16 %v265
    %v888 = vunpack.c.l.b16 %v266
    %v889 = vunpack.c.h.b16 %v266
    %v890 = vunpack.c.l.b16 %v267
    %v891 = vunpack.c.h.b16 %v267
    %v892 = vunpack.c.l.b16 %v268
    %v893 = vunpack.c.h.b16 %v268
    %v894 = vunpack.c.l.b16 %v269
    %v895 = vunpack.c.h.b16 %v269
    %v896 = vunpack.c.l.b16 %v270
    %v897 = vunpack.c.h.b16 %v270
    %v898 = vunpack.c.l.b16 %v271
    %v899 = vunpack.c.h.b16 %v271
    %v900 = vunpack.c.l.b16 %v272
    %v901 = vunpack.c.h.b16 %v272
    %v902 = vunpack.c.l.b16 %v273
    %v903 = vunpack.c.h.b16 %v273
    %v904 = vunpack.c.l.b16 %v274
    %v905 = vunpack.c.h.b16 %v274
    %v906 = vunpack.c.l.b16 %v275
    %v907 = vunpack.c.h.b16 %v275
    %v908 = vunpack.c.l.b16 %v276
    %v909 = vunpack.c.h.b16 %v276
    %v910 = vunpack.c.l.b16 %v277
    %v911 = vunpack.c.h.b16 %v277
    %v912 = vunpack.c.l.b16 %v278
    %v913 = vunpack.c.h.b16 %v278
    %v914 = vunpack.c.l.b16 %v279
    %v915 = vunpack.c.h.b16 %v279
    %v916 = vunpack.c.l.b16 %v280
    %v917 = vunpack.c.h.b16 %v280
    %v918 = vunpack.c.l.b16 %v281
    %v919 = vunpack.c.h.b16 %v281
    %v920 = vunpack.c.l.b16 %v282
    %v921 = vunpack.c.h.b16 %v282
    %v922 = vunpack.c.l.b16 %v283
    %v923 = vunpack.c.h.b16 %v283
    %v924 = vunpack.c.l.b16 %v284
    %v925 = vunpack.c.h.b16 %v284
    %v926 = vunpack.c.l.b16 %v285
    %v927 = vunpack.c.h.b16 %v285
    %v928 = vunpack.c.l.b16 %v286
    %v929 = vunpack.c.h.b16 %v286
    %v930 = vunpack.c.l.b16 %v287
    %v931 = vunpack.c.h.b16 %v287
    %v932 = vunpack.c.l.b16 %v288
    %v933 = vunpack.c.h.b16 %v288
    %v934 = vunpack.c.l.b16 %v289
    %v935 = vunpack.c.h.b16 %v289
    %v936 = vunpack.c.l.b16 %v290
    %v937 = vunpack.c.h.b16 %v290
    %v938 = vunpack.c.l.b16 %v291
    %v939 = vunpack.c.h.b16 %v291
    %v940 = vunpack.c.l.b16 %v292
    %v941 = vunpack.c.h.b16 %v292
    %v942 = vunpack.c.l.b16 %v293
    %v943 = vunpack.c.h.b16 %v293
    %v944 = vunpack.c.l.b16 %v294
    %v945 = vunpack.c.h.b16 %v294
    %v946 = vunpack.c.l.b16 %v295
    %v947 = vunpack.c.h.b16 %v295
    %v948 = vunpack.c.l.b16 %v296
    %v949 = vunpack.c.h.b16 %v296
    %v950 = vunpack.c.l.b16 %v297
    %v951 = vunpack.c.h.b16 %v297
    %v952 = vunpack.c.l.b16 %v298
    %v953 = vunpack.c.h.b16 %v298
    %v954 = vunpack.c.l.b16 %v299
    %v955 = vunpack.c.h.b16 %v299
    %v956 = vunpack.c.l.b16 %v300
    %v957 = vunpack.c.h.b16 %v300
    %v958 = vunpack.c.l.b16 %v301
    %v959 = vunpack.c.h.b16 %v301
    %v960 = vunpack.c.l.b16 %v302
    %v961 = vunpack.c.h.b16 %v302
    %v962 = vunpack.c.l.b16 %v303
    %v963 = vunpack.c.h.b16 %v303
    %v964 = vunpack.c.l.b16 %v304
    %v965 = vunpack.c.h.b16 %v304
    %v966 = vunpack.c.l.b16 %v305
    %v967 = vunpack.c.h.b16 %v305
    %v968 = vunpack.c.l.b16 %v306
    %v969 = vunpack.c.h.b16 %v306
    %v970 = vunpack.c.l.b16 %v307
    %v971 = vunpack.c.h.b16 %v307
    %v972 = vunpack.c.l.b16 %v308
    %v973 = vunpack.c.h.b16 %v308
    %v974 = vunpack.c.l.b16 %v309
    %v975 = vunpack.c.h.b16 %v309
    %v976 = vunpack.c.l.b16 %v310
    %v977 = vunpack.c.h.b16 %v310
    %v978 = vunpack.c.l.b16 %v311
    %v979 = vunpack.c.h.b16 %v311
    %v980 = vunpack.c.l.b16 %v312
    %v981 = vunpack.c.h.b16 %v312
    %v982 = vunpack.c.l.b16 %v313
    %v983 = vunpack.c.h.b16 %v313
    %v984 = vunpack.c.l.b16 %v314
    %v985 = vunpack.c.h.b16 %v314
    %v986 = vunpack.c.l.b16 %v315
    %v987 = vunpack.c.h.b16 %v315
    %v988 = vunpack.c.l.b16 %v316
    %v989 = vunpack.c.h.b16 %v316
    %v990 = vunpack.c.l.b16 %v317
    %v991 = vunpack.c.h.b16 %v317
    %v992 = vunpack.c.l.b16 %v318
    %v993 = vunpack.c.h.b16 %v318
    %v994 = vunpack.c.l.b16 %v319
    %v995 = vunpack.c.h.b16 %v319
    %v996 = vunpack.c.l.b16 %v320
    %v997 = vunpack.c.h.b16 %v320
    %v998 = vunpack.c.l.b16 %v321
    %v999 = vunpack.c.h.b16 %v321
    %v1000 = vunpack.c.l.b16 %v322
    %v1001 = vunpack.c.h.b16 %v322
    %v1002 = vunpack.c.l.b16 %v323
    %v1003 = vunpack.c.h.b16 %v323
    %v1004 = vunpack.c.l.b16 %v324
    %v1005 = vunpack.c.h.b16 %v324
    %v1006 = vunpack.c.l.b16 %v325
    %v1007 = vunpack.c.h.b16 %v325
    %v1008 = vunpack.c.l.b16 %v326
    %v1009 = vunpack.c.h.b16 %v326
    %v1010 = vunpack.c.l.b16 %v327
    %v1011 = vunpack.c.h.b16 %v327
    %v1012 = vunpack.c.l.b16 %v328
    %v1013 = vunpack.c.h.b16 %v328
    %v1014 = vunpack.c.l.b16 %v329
    %v1015 = vunpack.c.h.b16 %v329
    %v1016 = vunpack.c.l.b16 %v330
    %v1017 = vunpack.c.h.b16 %v330
    %v1018 = vunpack.c.l.b16 %v331
    %v1019 = vunpack.c.h.b16 %v331
    %v1020 = vunpack.c.l.b16 %v332
    %v1021 = vunpack.c.h.b16 %v332
    %v1022 = vunpack.c.l.b16 %v333
    %v1023 = vunpack.c.h.b16 %v333
    %v1024 = vunpack.c.l.b16 %v334
    %v1025 = vunpack.c.h.b16 %v334
    %v1026 = vunpack.c.l.b16 %v335
    %v1027 = vunpack.c.h.b16 %v335
    %v1028 = vunpack.c.l.b16 %v336
    %v1029 = vunpack.c.h.b16 %v336
    %v1030 = vunpack.c.l.b16 %v337
    %v1031 = vunpack.c.h.b16 %v337
    %v1032 = vpack.c.b16 %v588, %v584
    %v1033 = vpack.c.b16 %v589, %v585
    %v1034 = vpack.c.b16 %v590, %v586
    %v1035 = vpack.c.b16 %v591, %v587
    %v1036 = vpack.c.b16 %v596, %v592
    %v1037 = vpack.c.b16 %v597, %v593
    %v1038 = vpack.c.b16 %v598, %v594
    %v1039 = vpack.c.b16 %v599, %v595
    %v1040 = vpack.c.b16 %v604, %v600
    %v1041 = vpack.c.b16 %v605, %v601
    %v1042 = vpack.c.b16 %v606, %v602
    %v1043 = vpack.c.b16 %v607, %v603
    %v1044 = vpack.c.b16 %v612, %v608
    %v1045 = vpack.c.b16 %v613, %v609
    %v1046 = vpack.c.b16 %v614, %v610
    %v1047 = vpack.c.b16 %v615, %v611
    %v1048 = vpack.c.b16 %v620, %v616
    %v1049 = vpack.c.b16 %v621, %v617
    %v1050 = vpack.c.b16 %v622, %v618
    %v1051 = vpack.c.b16 %v623, %v619
    %v1052 = vpack.c.b16 %v628, %v624
    %v1053 = vpack.c.b16 %v629, %v625
    %v1054 = vpack.c.b16 %v630, %v626
    %v1055 = vpack.c.b16 %v631, %v627
    %v1056 = vpack.c.b16 %v636, %v632
    %v1057 = vpack.c.b16 %v637, %v633
    %v1058 = vpack.c.b16 %v638, %v634
    %v1059 = vpack.c.b16 %v639, %v635
    %v1060 = vpack.c.b16 %v644, %v640
    %v1061 = vpack.c.b16 %v645, %v641
    %v1062 = vpack.c.b16 %v646, %v642
    %v1063 = vpack.c.b16 %v647, %v643
    %v1064 = vpack.c.b16 %v652, %v648
    %v1065 = vpack.c.b16 %v653, %v649
    %v1066 = vpack.c.b16 %v654, %v650
    %v1067 = vpack.c.b16 %v655, %v651
    %v1068 = vpack.c.b16 %v660, %v656
    %v1069 = vpack.c.b16 %v661, %v657
    %v1070 = vpack.c.b16 %v662, %v658
    %v1071 = vpack.c.b16 %v663, %v659
    %v1072 = vpack.c.b16 %v668, %v664
    %v1073 = vpack.c.b16 %v669, %v665
    %v1074 = vpack.c.b16 %v670, %v666
    %v1075 = vpack.c.b16 %v671, %v667
    %v1076 = vpack.c.b16 %v676, %v672
    %v1077 = vpack.c.b16 %v677, %v673
    %v1078 = vpack.c.b16 %v678, %v674
    %v1079 = vpack.c.b16 %v679, %v675
    %v1080 = vpack.c.b16 %v684, %v680
    %v1081 = vpack.c.b16 %v685, %v681
    %v1082 = vpack.c.b16 %v686, %v682
    %v1083 = vpack.c.b16 %v687, %v683
    %v1084 = vpack.c.b16 %v692, %v688
    %v1085 = vpack.c.b16 %v693, %v689
    %v1086 = vpack.c.b16 %v694, %v690
    %v1087 = vpack.c.b16 %v695, %v691
    %v1088 = vpack.c.b16 %v700, %v696
    %v1089 = vpack.c.b16 %v701, %v697
    %v1090 = vpack.c.b16 %v702, %v698
    %v1091 = vpack.c.b16 %v703, %v699
    %v1092 = vpack.c.b16 %v708, %v704
    %v1093 = vpack.c.b16 %v709, %v705
    %v1094 = vpack.c.b16 %v710, %v706
    %v1095 = vpack.c.b16 %v711, %v707
    %v1096 = vpack.c.b16 %v716, %v712
    %v1097 = vpack.c.b16 %v717, %v713
    %v1098 = vpack.c.b16 %v718, %v714
    %v1099 = vpack.c.b16 %v719, %v715
    %v1100 = vpack.c.b16 %v724, %v720
    %v1101 = vpack.c.b16 %v725, %v721
    %v1102 = vpack.c.b16 %v726, %v722
    %v1103 = vpack.c.b16 %v727, %v723
    %v1104 = vpack.c.b16 %v732, %v728
    %v1105 = vpack.c.b16 %v733, %v729
    %v1106 = vpack.c.b16 %v734, %v730
    %v1107 = vpack.c.b16 %v735, %v731
    %v1108 = vpack.c.b16 %v740, %v736
    %v1109 = vpack.c.b16 %v741, %v737
    %v1110 = vpack.c.b16 %v742, %v738
    %v1111 = vpack.c.b16 %v743, %v739
    %v1112 = vpack.c.b16 %v748, %v744
    %v1113 = vpack.c.b16 %v749, %v745
    %v1114 = vpack.c.b16 %v750, %v746
    %v1115 = vpack.c.b16 %v751, %v747
    %v1116 = vpack.c.b16 %v756, %v752
    %v1117 = vpack.c.b16 %v757, %v753
    %v1118 = vpack.c.b16 %v758, %v754
    %v1119 = vpack.c.b16 %v759, %v755
    %v1120 = vpack.c.b16 %v764, %v760
    %v1121 = vpack.c.b16 %v765, %v761
    %v1122 = vpack.c.b16 %v766, %v762
    %v1123 = vpack.c.b16 %v767, %v763
    %v1124 = vpack.c.b16 %v772, %v768
    %v1125 = vpack.c.b16 %v773, %v769
    %v1126 = vpack.c.b16 %v774, %v770
    %v1127 = vpack.c.b16 %v775, %v771
    %v1128 = vpack.c.b16 %v780, %v776
    %v1129 = vpack.c.b16 %v781, %v777
    %v1130 = vpack.c.b16 %v782, %v778
    %v1131 = vpack.c.b16 %v783, %v779
    %v1132 = vpack.c.b16 %v788, %v784
    %v1133 = vpack.c.b16 %v789, %v785
    %v1134 = vpack.c.b16 %v790, %v786
    %v1135 = vpack.c.b16 %v791, %v787
    %v1136 = vpack.c.b16 %v796, %v792
    %v1137 = vpack.c.b16 %v797, %v793
    %v1138 = vpack.c.b16 %v798, %v794
    %v1139 = vpack.c.b16 %v799, %v795
    %v1140 = vpack.c.b16 %v804, %v800
    %v1141 = vpack.c.b16 %v805, %v801
    %v1142 = vpack.c.b16 %v806, %v802
    %v1143 = vpack.c.b16 %v807, %v803
    %v1144 = vpack.c.b16 %v812, %v808
    %v1145 = vpack.c.b16 %v813, %v809
    %v1146 = vpack.c.b16 %v814, %v810
    %v1147 = vpack.c.b16 %v815, %v811
    %v1148 = vpack.c.b16 %v820, %v816
    %v1149 = vpack.c.b16 %v821, %v817
    %v1150 = vpack.c.b16 %v822, %v818
    %v1151 = vpack.c.b16 %v823, %v819
    %v1152 = vpack.c.b16 %v828, %v824
    %v1153 = vpack.c.b16 %v829, %v825
    %v1154 = vpack.c.b16 %v830, %v826
    %v1155 = vpack.c.b16 %v831, %v827
    %v1156 = vpack.c.b16 %v836, %v832
    %v1157 = vpack.c.b16 %v837, %v833
    %v1158 = vpack.c.b16 %v838, %v834
    %v1159 = vpack.c.b16 %v839, %v835
    %v1160 = vpack.c.b16 %v844, %v840
    %v1161 = vpack.c.b16 %v845, %v841
    %v1162 = vpack.c.b16 %v846, %v842
    %v1163 = vpack.c.b16 %v847, %v843
    %v1164 = vpack.c.b16 %v852, %v848
    %v1165 = vpack.c.b16 %v853, %v849
    %v1166 = vpack.c.b16 %v854, %v850
    %v1167 = vpack.c.b16 %v855, %v851
    %v1168 = vpack.c.b16 %v860, %v856
    %v1169 = vpack.c.b16 %v861, %v857
    %v1170 = vpack.c.b16 %v862, %v858
    %v1171 = vpack.c.b16 %v863, %v859
    %v1172 = vpack.c.b16 %v868, %v864
    %v1173 = vpack.c.b16 %v869, %v865
    %v1174 = vpack.c.b16 %v870, %v866
    %v1175 = vpack.c.b16 %v871, %v867
    %v1176 = vpack.c.b16 %v876, %v872
    %v1177 = vpack.c.b16 %v877, %v873
    %v1178 = vpack.c.b16 %v878, %v874
    %v1179 = vpack.c.b16 %v879, %v875
    %v1180 = vpack.c.b16 %v884, %v880
    %v1181 = vpack.c.b16 %v885, %v881
    %v1182 = vpack.c.b16 %v886, %v882
    %v1183 = vpack.c.b16 %v887, %v883
    %v1184 = vpack.c.b16 %v892, %v888
    %v1185 = vpack.c.b16 %v893, %v889
    %v1186 = vpack.c.b16 %v894, %v890
    %v1187 = vpack.c.b16 %v895, %v891
    %v1188 = vpack.c.b16 %v900, %v896
    %v1189 = vpack.c.b16 %v901, %v897
    %v1190 = vpack.c.b16 %v902, %v898
    %v1191 = vpack.c.b16 %v903, %v899
    %v1192 = vpack.c.b16 %v908, %v904
    %v1193 = vpack.c.b16 %v909, %v905
    %v1194 = vpack.c.b16 %v910, %v906
    %v1195 = vpack.c.b16 %v911, %v907
    %v1196 = vpack.c.b16 %v916, %v912
    %v1197 = vpack.c.b16 %v917, %v913
    %v1198 = vpack.c.b16 %v918, %v914
    %v1199 = vpack.c.b16 %v919, %v915
    %v1200 = vpack.c.b16 %v924, %v920
    %v1201 = vpack.c.b16 %v925, %v921
    %v1202 = vpack.c.b16 %v926, %v922
    %v1203 = vpack.c.b16 %v927, %v923
    %v1204 = vpack.c.b16 %v932, %v928
    %v1205 = vpack.c.b16 %v933, %v929
    %v1206 = vpack.c.b16 %v934, %v930
    %v1207 = vpack.c.b16 %v935, %v931
    %v1208 = vpack.c.b16 %v940, %v936
    %v1209 = vpack.c.b16 %v941, %v937
    %v1210 = vpack.c.b16 %v942, %v938
    %v1211 = vpack.c.b16 %v943, %v939
    %v1212 = vpack.c.b16 %v948, %v944
    %v1213 = vpack.c.b16 %v949, %v945
    %v1214 = vpack.c.b16 %v950, %v946
    %v1215 = vpack.c.b16 %v951, %v947
    %v1216 = vpack.c.b16 %v956, %v952
    %v1217 = vpack.c.b16 %v957, %v953
    %v1218 = vpack.c.b16 %v958, %v954
    %v1219 = vpack.c.b16 %v959, %v955
    %v1220 = vpack.c.b16 %v964, %v960
    %v1221 = vpack.c.b16 %v965, %v961
    %v1222 = vpack.c.b16 %v966, %v962
    %v1223 = vpack.c.b16 %v967, %v963
    %v1224 = vpack.c.b16 %v972, %v968
    %v1225 = vpack.c.b16 %v973, %v969
    %v1226 = vpack.c.b16 %v974, %v970
    %v1227 = vpack.c.b16 %v975, %v971
    %v1228 = vpack.c.b16 %v980, %v976
    %v1229 = vpack.c.b16 %v981, %v977
    %v1230 = vpack.c.b16 %v982, %v978
    %v1231 = vpack.c.b16 %v983, %v979
    %v1232 = vpack.c.b16 %v988, %v984
    %v1233 = vpack.c.b16 %v989, %v985
    %v1234 = vpack.c.b16 %v990, %v986
    %v1235 = vpack.c.b16 %v991, %v987
    %v1236 = vpack.c.b16 %v996, %v992
    %v1237 = vpack.c.b16 %v997, %v993
    %v1238 = vpack.c.b16 %v998, %v994
    %v1239 = vpack.c.b16 %v999, %v995
    %v1240 = vpack.c.b16 %v1004, %v1000
    %v1241 = vpack.c.b16 %v1005, %v1001
    %v1242 = vpack.c.b16 %v1006, %v1002
    %v1243 = vpack.c.b16 %v1007, %v1003
    %v1244 = vpack.c.b16 %v1012, %v1008
    %v1245 = vpack.c.b16 %v1013, %v1009
    %v1246 = vpack.c.b16 %v1014, %v1010
    %v1247 = vpack.c.b16 %v1015, %v1011
    %v1248 = vpack.c.b16 %v1020, %v1016
    %v1249 = vpack.c.b16 %v1021, %v1017
    %v1250 = vpack.c.b16 %v1022, %v1018
    %v1251 = vpack.c.b16 %v1023, %v1019
    %v1252 = vpack.c.b16 %v1028, %v1024
    %v1253 = vpack.c.b16 %v1029, %v1025
    %v1254 = vpack.c.b16 %v1030, %v1026
    %v1255 = vpack.c.b16 %v1031, %v1027
    %1480 = vmatprep.subr.bf16.mxu0 %v1033
    %1481 = vmatpush1.bf16.msra.mxu0 %v1032
    %1482 = vmatprep.subr.bf16.mxu0 %v1037
    %1483 = vmatpush1.bf16.msra.mxu0 %v1036
    %1484 = vmatprep.subr.bf16.mxu0 %v1041
    %1485 = vmatpush1.bf16.msra.mxu0 %v1040
    %1486 = vmatprep.subr.bf16.mxu0 %v1045
    %1487 = vmatpush1.bf16.msra.mxu0 %v1044
    %1488 = vmatprep.subr.bf16.mxu0 %v1049
    %1489 = vmatpush1.bf16.msra.mxu0 %v1048
    %1490 = vmatprep.subr.bf16.mxu0 %v1053
    %1491 = vmatpush1.bf16.msra.mxu0 %v1052
    %1492 = vmatprep.subr.bf16.mxu0 %v1057
    %1493 = vmatpush1.bf16.msra.mxu0 %v1056
    %1494 = vmatprep.subr.bf16.mxu0 %v1061
    %1495 = vmatpush1.bf16.msra.mxu0 %v1060
    %1496 = vmatprep.subr.bf16.mxu0 %v1065
    %1497 = vmatpush1.bf16.msra.mxu0 %v1064
    %1498 = vmatprep.subr.bf16.mxu0 %v1069
    %1499 = vmatpush1.bf16.msra.mxu0 %v1068
    %1500 = vmatprep.subr.bf16.mxu0 %v1073
    %1501 = vmatpush1.bf16.msra.mxu0 %v1072
    %1502 = vmatprep.subr.bf16.mxu0 %v1077
    %1503 = vmatpush1.bf16.msra.mxu0 %v1076
    %1504 = vmatprep.subr.bf16.mxu0 %v1081
    %1505 = vmatpush1.bf16.msra.mxu0 %v1080
    %1506 = vmatprep.subr.bf16.mxu0 %v1085
    %1507 = vmatpush1.bf16.msra.mxu0 %v1084
    %1508 = vmatprep.subr.bf16.mxu0 %v1089
    %1509 = vmatpush1.bf16.msra.mxu0 %v1088
    %1510 = vmatprep.subr.bf16.mxu0 %v1093
    %1511 = vmatpush1.bf16.msra.mxu0 %v1092
    %1512 = vmatprep.mubr.bf16.mxu0 %v108
    %1513 = vmatmul.mubr.bf16.gmra.mrb[0].mxu0 %v107
    %v1514 = vpop.f32.mrb[0].mxu0
    %v1515 = vadd.f32 %v343, %v1514
    %v1516 = vpop.f32.mrb[0].mxu0
    %v1517 = vadd.f32 %v347, %v1516
    %v1518 = vpop.f32.mrb[0].mxu0
    %v1519 = vpop.f32.mrb[0].mxu0
    %1520 = vdwg.mxu0
    %1521 = vmatprep.subr.bf16.mxu0 %v1097
    %1522 = vmatpush1.bf16.msra.mxu0 %v1096
    %1523 = vmatprep.subr.bf16.mxu0 %v1101
    %1524 = vmatpush1.bf16.msra.mxu0 %v1100
    %1525 = vmatprep.subr.bf16.mxu0 %v1105
    %1526 = vmatpush1.bf16.msra.mxu0 %v1104
    %1527 = vmatprep.subr.bf16.mxu0 %v1109
    %1528 = vmatpush1.bf16.msra.mxu0 %v1108
    %1529 = vmatprep.subr.bf16.mxu0 %v1113
    %1530 = vmatpush1.bf16.msra.mxu0 %v1112
    %1531 = vmatprep.subr.bf16.mxu0 %v1117
    %1532 = vmatpush1.bf16.msra.mxu0 %v1116
    %1533 = vmatprep.subr.bf16.mxu0 %v1121
    %1534 = vmatpush1.bf16.msra.mxu0 %v1120
    %1535 = vmatprep.subr.bf16.mxu0 %v1125
    %1536 = vmatpush1.bf16.msra.mxu0 %v1124
    %1537 = vmatprep.subr.bf16.mxu0 %v1129
    %1538 = vmatpush1.bf16.msra.mxu0 %v1128
    %1539 = vmatprep.subr.bf16.mxu0 %v1133
    %1540 = vmatpush1.bf16.msra.mxu0 %v1132
    %1541 = vmatprep.subr.bf16.mxu0 %v1137
    %1542 = vmatpush1.bf16.msra.mxu0 %v1136
    %1543 = vmatprep.subr.bf16.mxu0 %v1141
    %1544 = vmatpush1.bf16.msra.mxu0 %v1140
    %1545 = vmatprep.subr.bf16.mxu0 %v1145
    %1546 = vmatpush1.bf16.msra.mxu0 %v1144
    %1547 = vmatprep.subr.bf16.mxu0 %v1149
    %1548 = vmatpush1.bf16.msra.mxu0 %v1148
    %1549 = vmatprep.subr.bf16.mxu0 %v1153
    %1550 = vmatpush1.bf16.msra.mxu0 %v1152
    %1551 = vmatprep.subr.bf16.mxu0 %v1157
    %1552 = vmatpush1.bf16.msra.mxu0 %v1156
    %1553 = vmatprep.mubr.bf16.mxu0 %v110
    %1554 = vmatmul.mubr.bf16.gmra.mrb[0].mxu0 %v109
    %v1555 = vpop.f32.mrb[0].mxu0
    %v1556 = vadd.f32 %v1515, %v1555
    %v1557 = vpop.f32.mrb[0].mxu0
    %v1558 = vadd.f32 %v1517, %v1557
    %v1559 = vpop.f32.mrb[0].mxu0
    %v1560 = vpop.f32.mrb[0].mxu0
    %1561 = vdwg.mxu0
    %1562 = vmatprep.subr.bf16.mxu0 %v1161
    %1563 = vmatpush1.bf16.msra.mxu0 %v1160
    %1564 = vmatprep.subr.bf16.mxu0 %v1165
    %1565 = vmatpush1.bf16.msra.mxu0 %v1164
    %1566 = vmatprep.subr.bf16.mxu0 %v1169
    %1567 = vmatpush1.bf16.msra.mxu0 %v1168
    %1568 = vmatprep.subr.bf16.mxu0 %v1173
    %1569 = vmatpush1.bf16.msra.mxu0 %v1172
    %1570 = vmatprep.subr.bf16.mxu0 %v1177
    %1571 = vmatpush1.bf16.msra.mxu0 %v1176
    %1572 = vmatprep.subr.bf16.mxu0 %v1181
    %1573 = vmatpush1.bf16.msra.mxu0 %v1180
    %1574 = vmatprep.subr.bf16.mxu0 %v1185
    %1575 = vmatpush1.bf16.msra.mxu0 %v1184
    %1576 = vmatprep.subr.bf16.mxu0 %v1189
    %1577 = vmatpush1.bf16.msra.mxu0 %v1188
    %1578 = vmatprep.subr.bf16.mxu0 %v1193
    %1579 = vmatpush1.bf16.msra.mxu0 %v1192
    %1580 = vmatprep.subr.bf16.mxu0 %v1197
    %1581 = vmatpush1.bf16.msra.mxu0 %v1196
    %1582 = vmatprep.subr.bf16.mxu0 %v1201
    %1583 = vmatpush1.bf16.msra.mxu0 %v1200
    %1584 = vmatprep.subr.bf16.mxu0 %v1205
    %1585 = vmatpush1.bf16.msra.mxu0 %v1204
    %1586 = vmatprep.subr.bf16.mxu0 %v1209
    %1587 = vmatpush1.bf16.msra.mxu0 %v1208
    %1588 = vmatprep.subr.bf16.mxu0 %v1213
    %1589 = vmatpush1.bf16.msra.mxu0 %v1212
    %1590 = vmatprep.subr.bf16.mxu0 %v1217
    %1591 = vmatpush1.bf16.msra.mxu0 %v1216
    %1592 = vmatprep.subr.bf16.mxu0 %v1221
    %1593 = vmatpush1.bf16.msra.mxu0 %v1220
    %1594 = vmatprep.mubr.bf16.mxu0 %v112
    %1595 = vmatmul.mubr.bf16.gmra.mrb[0].mxu0 %v111
    %v1596 = vpop.f32.mrb[0].mxu0
    %v1597 = vadd.f32 %v1556, %v1596
    %v1598 = vpop.f32.mrb[0].mxu0
    %v1599 = vadd.f32 %v1558, %v1598
    %v1600 = vpop.f32.mrb[0].mxu0
    %v1601 = vpop.f32.mrb[0].mxu0
    %1602 = vdwg.mxu0
    %1603 = vmatprep.subr.bf16.mxu0 %v1225
    %1604 = vmatpush1.bf16.msra.mxu0 %v1224
    %1605 = vmatprep.subr.bf16.mxu0 %v1229
    %1606 = vmatpush1.bf16.msra.mxu0 %v1228
    %1607 = vmatprep.subr.bf16.mxu0 %v1233
    %1608 = vmatpush1.bf16.msra.mxu0 %v1232
    %1609 = vmatprep.subr.bf16.mxu0 %v1237
    %1610 = vmatpush1.bf16.msra.mxu0 %v1236
    %1611 = vmatprep.subr.bf16.mxu0 %v1241
    %1612 = vmatpush1.bf16.msra.mxu0 %v1240
    %1613 = vmatprep.subr.bf16.mxu0 %v1245
    %1614 = vmatpush1.bf16.msra.mxu0 %v1244
    %1615 = vmatprep.subr.bf16.mxu0 %v1249
    %1616 = vmatpush1.bf16.msra.mxu0 %v1248
    %1617 = vmatprep.subr.bf16.mxu0 %v1253
    %1618 = vmatpush1.bf16.msra.mxu0 %v1252
    %1619 = vmatprep.subr.bf16.mxu0 0
    %1620 = vmatpush1.bf16.msra.mxu0 0
    %1621 = vmatprep.subr.bf16.mxu0 0
    %1622 = vmatpush1.bf16.msra.mxu0 0
    %1623 = vmatprep.subr.bf16.mxu0 0
    %1624 = vmatpush1.bf16.msra.mxu0 0
    %1625 = vmatprep.subr.bf16.mxu0 0
    %1626 = vmatpush1.bf16.msra.mxu0 0
    %1627 = vmatprep.subr.bf16.mxu0 0
    %1628 = vmatpush1.bf16.msra.mxu0 0
    %1629 = vmatprep.subr.bf16.mxu0 0
    %1630 = vmatpush1.bf16.msra.mxu0 0
    %1631 = vmatprep.subr.bf16.mxu0 0
    %1632 = vmatpush1.bf16.msra.mxu0 0
    %1633 = vmatprep.subr.bf16.mxu0 0
    %1634 = vmatpush1.bf16.msra.mxu0 0
    %1635 = vmatprep.mubr.bf16.mxu0 0
    %1636 = vmatmul.mubr.bf16.gmra.mrb[0].mxu0 %v113
    %v1637 = vpop.f32.mrb[0].mxu0
    %v1638 = vadd.f32 %v1597, %v1637
    %v1639 = vpop.f32.mrb[0].mxu0
    %v1640 = vadd.f32 %v1599, %v1639
    %v1641 = vpop.f32.mrb[0].mxu0
    %v1642 = vpop.f32.mrb[0].mxu0
    %1643 = vdwg.mxu0
    %1644 = vmatprep.subr.bf16.mxu0 %v1035
    %1645 = vmatpush1.bf16.msra.mxu0 %v1034
    %1646 = vmatprep.subr.bf16.mxu0 %v1039
    %1647 = vmatpush1.bf16.msra.mxu0 %v1038
    %1648 = vmatprep.subr.bf16.mxu0 %v1043
    %1649 = vmatpush1.bf16.msra.mxu0 %v1042
    %1650 = vmatprep.subr.bf16.mxu0 %v1047
    %1651 = vmatpush1.bf16.msra.mxu0 %v1046
    %1652 = vmatprep.subr.bf16.mxu0 %v1051
    %1653 = vmatpush1.bf16.msra.mxu0 %v1050
    %1654 = vmatprep.subr.bf16.mxu0 %v1055
    %1655 = vmatpush1.bf16.msra.mxu0 %v1054
    %1656 = vmatprep.subr.bf16.mxu0 %v1059
    %1657 = vmatpush1.bf16.msra.mxu0 %v1058
    %1658 = vmatprep.subr.bf16.mxu0 %v1063
    %1659 = vmatpush1.bf16.msra.mxu0 %v1062
    %1660 = vmatprep.subr.bf16.mxu0 %v1067
    %1661 = vmatpush1.bf16.msra.mxu0 %v1066
    %1662 = vmatprep.subr.bf16.mxu0 %v1071
    %1663 = vmatpush1.bf16.msra.mxu0 %v1070
    %1664 = vmatprep.subr.bf16.mxu0 %v1075
    %1665 = vmatpush1.bf16.msra.mxu0 %v1074
    %1666 = vmatprep.subr.bf16.mxu0 %v1079
    %1667 = vmatpush1.bf16.msra.mxu0 %v1078
    %1668 = vmatprep.subr.bf16.mxu0 %v1083
    %1669 = vmatpush1.bf16.msra.mxu0 %v1082
    %1670 = vmatprep.subr.bf16.mxu0 %v1087
    %1671 = vmatpush1.bf16.msra.mxu0 %v1086
    %1672 = vmatprep.subr.bf16.mxu0 %v1091
    %1673 = vmatpush1.bf16.msra.mxu0 %v1090
    %1674 = vmatprep.subr.bf16.mxu0 %v1095
    %1675 = vmatpush1.bf16.msra.mxu0 %v1094
    %1676 = vmatprep.mubr.bf16.mxu0 %v108
    %1677 = vmatmul.mubr.bf16.gmra.mrb[0].mxu0 %v107
    %v1678 = vpop.f32.mrb[0].mxu0
    %v1679 = vadd.f32 %v351, %v1678
    %v1680 = vpop.f32.mrb[0].mxu0
    %v1681 = vadd.f32 %v355, %v1680
    %v1682 = vpop.f32.mrb[0].mxu0
    %v1683 = vpop.f32.mrb[0].mxu0
    %1684 = vdwg.mxu0
    %1685 = vmatprep.subr.bf16.mxu0 %v1099
    %1686 = vmatpush1.bf16.msra.mxu0 %v1098
    %1687 = vmatprep.subr.bf16.mxu0 %v1103
    %1688 = vmatpush1.bf16.msra.mxu0 %v1102
    %1689 = vmatprep.subr.bf16.mxu0 %v1107
    %1690 = vmatpush1.bf16.msra.mxu0 %v1106
    %1691 = vmatprep.subr.bf16.mxu0 %v1111
    %1692 = vmatpush1.bf16.msra.mxu0 %v1110
    %1693 = vmatprep.subr.bf16.mxu0 %v1115
    %1694 = vmatpush1.bf16.msra.mxu0 %v1114
    %1695 = vmatprep.subr.bf16.mxu0 %v1119
    %1696 = vmatpush1.bf16.msra.mxu0 %v1118
    %1697 = vmatprep.subr.bf16.mxu0 %v1123
    %1698 = vmatpush1.bf16.msra.mxu0 %v1122
    %1699 = vmatprep.subr.bf16.mxu0 %v1127
    %1700 = vmatpush1.bf16.msra.mxu0 %v1126
    %1701 = vmatprep.subr.bf16.mxu0 %v1131
    %1702 = vmatpush1.bf16.msra.mxu0 %v1130
    %1703 = vmatprep.subr.bf16.mxu0 %v1135
    %1704 = vmatpush1.bf16.msra.mxu0 %v1134
    %1705 = vmatprep.subr.bf16.mxu0 %v1139
    %1706 = vmatpush1.bf16.msra.mxu0 %v1138
    %1707 = vmatprep.subr.bf16.mxu0 %v1143
    %1708 = vmatpush1.bf16.msra.mxu0 %v1142
    %1709 = vmatprep.subr.bf16.mxu0 %v1147
    %1710 = vmatpush1.bf16.msra.mxu0 %v1146
    %1711 = vmatprep.subr.bf16.mxu0 %v1151
    %1712 = vmatpush1.bf16.msra.mxu0 %v1150
    %1713 = vmatprep.subr.bf16.mxu0 %v1155
    %1714 = vmatpush1.bf16.msra.mxu0 %v1154
    %1715 = vmatprep.subr.bf16.mxu0 %v1159
    %1716 = vmatpush1.bf16.msra.mxu0 %v1158
    %1717 = vmatprep.mubr.bf16.mxu0 %v110
    %1718 = vmatmul.mubr.bf16.gmra.mrb[0].mxu0 %v109
    %v1719 = vpop.f32.mrb[0].mxu0
    %v1720 = vadd.f32 %v1679, %v1719
    %v1721 = vpop.f32.mrb[0].mxu0
    %v1722 = vadd.f32 %v1681, %v1721
    %v1723 = vpop.f32.mrb[0].mxu0
    %v1724 = vpop.f32.mrb[0].mxu0
    %1725 = vdwg.mxu0
    %1726 = vmatprep.subr.bf16.mxu0 %v1163
    %1727 = vmatpush1.bf16.msra.mxu0 %v1162
    %1728 = vmatprep.subr.bf16.mxu0 %v1167
    %1729 = vmatpush1.bf16.msra.mxu0 %v1166
    %1730 = vmatprep.subr.bf16.mxu0 %v1171
    %1731 = vmatpush1.bf16.msra.mxu0 %v1170
    %1732 = vmatprep.subr.bf16.mxu0 %v1175
    %1733 = vmatpush1.bf16.msra.mxu0 %v1174
    %1734 = vmatprep.subr.bf16.mxu0 %v1179
    %1735 = vmatpush1.bf16.msra.mxu0 %v1178
    %1736 = vmatprep.subr.bf16.mxu0 %v1183
    %1737 = vmatpush1.bf16.msra.mxu0 %v1182
    %1738 = vmatprep.subr.bf16.mxu0 %v1187
    %1739 = vmatpush1.bf16.msra.mxu0 %v1186
    %1740 = vmatprep.subr.bf16.mxu0 %v1191
    %1741 = vmatpush1.bf16.msra.mxu0 %v1190
    %1742 = vmatprep.subr.bf16.mxu0 %v1195
    %1743 = vmatpush1.bf16.msra.mxu0 %v1194
    %1744 = vmatprep.subr.bf16.mxu0 %v1199
    %1745 = vmatpush1.bf16.msra.mxu0 %v1198
    %1746 = vmatprep.subr.bf16.mxu0 %v1203
    %1747 = vmatpush1.bf16.msra.mxu0 %v1202
    %1748 = vmatprep.subr.bf16.mxu0 %v1207
    %1749 = vmatpush1.bf16.msra.mxu0 %v1206
    %1750 = vmatprep.subr.bf16.mxu0 %v1211
    %1751 = vmatpush1.bf16.msra.mxu0 %v1210
    %1752 = vmatprep.subr.bf16.mxu0 %v1215
    %1753 = vmatpush1.bf16.msra.mxu0 %v1214
    %1754 = vmatprep.subr.bf16.mxu0 %v1219
    %1755 = vmatpush1.bf16.msra.mxu0 %v1218
    %1756 = vmatprep.subr.bf16.mxu0 %v1223
    %1757 = vmatpush1.bf16.msra.mxu0 %v1222
    %1758 = vmatprep.mubr.bf16.mxu0 %v112
    %1759 = vmatmul.mubr.bf16.gmra.mrb[0].mxu0 %v111
    %v1760 = vpop.f32.mrb[0].mxu0
    %v1761 = vadd.f32 %v1720, %v1760
    %v1762 = vpop.f32.mrb[0].mxu0
    %v1763 = vadd.f32 %v1722, %v1762
    %v1764 = vpop.f32.mrb[0].mxu0
    %v1765 = vpop.f32.mrb[0].mxu0
    %1766 = vdwg.mxu0
    %1767 = vmatprep.subr.bf16.mxu0 %v1227
    %1768 = vmatpush1.bf16.msra.mxu0 %v1226
    %1769 = vmatprep.subr.bf16.mxu0 %v1231
    %1770 = vmatpush1.bf16.msra.mxu0 %v1230
    %1771 = vmatprep.subr.bf16.mxu0 %v1235
    %1772 = vmatpush1.bf16.msra.mxu0 %v1234
    %1773 = vmatprep.subr.bf16.mxu0 %v1239
    %1774 = vmatpush1.bf16.msra.mxu0 %v1238
    %1775 = vmatprep.subr.bf16.mxu0 %v1243
    %1776 = vmatpush1.bf16.msra.mxu0 %v1242
    %1777 = vmatprep.subr.bf16.mxu0 %v1247
    %1778 = vmatpush1.bf16.msra.mxu0 %v1246
    %1779 = vmatprep.subr.bf16.mxu0 %v1251
    %1780 = vmatpush1.bf16.msra.mxu0 %v1250
    %1781 = vmatprep.subr.bf16.mxu0 %v1255
    %1782 = vmatpush1.bf16.msra.mxu0 %v1254
    %1783 = vmatprep.subr.bf16.mxu0 0
    %1784 = vmatpush1.bf16.msra.mxu0 0
    %1785 = vmatprep.subr.bf16.mxu0 0
    %1786 = vmatpush1.bf16.msra.mxu0 0
    %1787 = vmatprep.subr.bf16.mxu0 0
    %1788 = vmatpush1.bf16.msra.mxu0 0
    %1789 = vmatprep.subr.bf16.mxu0 0
    %1790 = vmatpush1.bf16.msra.mxu0 0
    %1791 = vmatprep.subr.bf16.mxu0 0
    %1792 = vmatpush1.bf16.msra.mxu0 0
    %1793 = vmatprep.subr.bf16.mxu0 0
    %1794 = vmatpush1.bf16.msra.mxu0 0
    %1795 = vmatprep.subr.bf16.mxu0 0
    %1796 = vmatpush1.bf16.msra.mxu0 0
    %1797 = vmatprep.subr.bf16.mxu0 0
    %1798 = vmatpush1.bf16.msra.mxu0 0
    %1799 = vmatprep.mubr.bf16.mxu0 0
    %1800 = vmatmul.mubr.bf16.gmra.mrb[0].mxu0 %v113
    %v1801 = vpop.f32.mrb[0].mxu0
    %v1802 = vadd.f32 %v1761, %v1801
    %v1803 = vpop.f32.mrb[0].mxu0
    %v1804 = vadd.f32 %v1763, %v1803
    %v1805 = vpop.f32.mrb[0].mxu0
    %v1806 = vpop.f32.mrb[0].mxu0
    %1807 = vdwg.mxu0
    %v1808 = vmax.f32 %v1638, 0.0
    %v1809 = vmax.f32 %v1640, 0.0
    %v1810 = vmax.f32 %v1802, 0.0
    %v1811 = vmax.f32 %v1804, 0.0
    %v1812 = vpack.c.bf16 %v1808, %v1808
    %v1813 = vpack.c.bf16 %v1809, %v1809
    %v1814 = vpack.c.bf16 %v1810, %v1810
    %v1815 = vpack.c.bf16 %v1811, %v1811
    %v1816 = vld [vmem:[#allocation7] sm:$0xff]
    %v1817 = vld [vmem:[#allocation7 + $0x8] sm:$0xff]
    %v1818 = vld [vmem:[#allocation7 + $0x10] sm:$0xff]
    %v1819 = vld [vmem:[#allocation7 + $0x18] sm:$0xff]
    %v1820 = vld [vmem:[#allocation7 + $0x20] sm:$0xff]
    %v1821 = vld [vmem:[#allocation7 + $0x28] sm:$0xff]
    %v1822 = vld [vmem:[#allocation7 + $0x30] sm:$0xff]
    %v1823 = vld [vmem:[#allocation7 + $0x38] sm:$0xff]
    %v1824 = vld [vmem:[#allocation7 + $0x40] sm:$0xff]
    %v1825 = vld [vmem:[#allocation7 + $0x48] sm:$0xff]
    %v1826 = vld [vmem:[#allocation7 + $0x50] sm:$0xff]
    %v1827 = vld [vmem:[#allocation7 + $0x58] sm:$0xff]
    %v1828 = vld [vmem:[#allocation7 + $0x60] sm:$0xff]
    %v1829 = vld [vmem:[#allocation7 + $0x68] sm:$0xff]
    %v1830 = vld [vmem:[#allocation7 + $0x70] sm:$0xff]
    %v1831 = vld [vmem:[#allocation7 + $0x78] sm:$0xff]
    %v1832 = vld [vmem:[#allocation7 + $0x80] sm:$0xff]
    %v1833 = vld [vmem:[#allocation7 + $0x88] sm:$0xff]
    %v1834 = vld [vmem:[#allocation7 + $0x90] sm:$0xff]
    %v1835 = vld [vmem:[#allocation7 + $0x98] sm:$0xff]
    %v1836 = vld [vmem:[#allocation7 + $0xa0] sm:$0xff]
    %v1837 = vld [vmem:[#allocation7 + $0xa8] sm:$0xff]
    %v1838 = vld [vmem:[#allocation7 + $0xb0] sm:$0xff]
    %v1839 = vld [vmem:[#allocation7 + $0xb8] sm:$0xff]
    %v1840 = vld [vmem:[#allocation7 + $0xc0] sm:$0xff]
    %v1841 = vld [vmem:[#allocation7 + $0xc8] sm:$0xff]
    %v1842 = vld [vmem:[#allocation7 + $0xd0] sm:$0xff]
    %v1843 = vld [vmem:[#allocation7 + $0xd8] sm:$0xff]
    %v1844 = vld [vmem:[#allocation7 + $0xe0] sm:$0xff]
    %v1845 = vld [vmem:[#allocation7 + $0xe8] sm:$0xff]
    %v1846 = vld [vmem:[#allocation7 + $0xf0] sm:$0xff]
    %v1847 = vld [vmem:[#allocation7 + $0xf8] sm:$0xff]
    %v1848 = vld [vmem:[#allocation7 + $0x100] sm:$0xff]
    %v1849 = vld [vmem:[#allocation7 + $0x108] sm:$0xff]
    %v1850 = vld [vmem:[#allocation7 + $0x110] sm:$0xff]
    %v1851 = vld [vmem:[#allocation7 + $0x118] sm:$0xff]
    %v1852 = vld [vmem:[#allocation7 + $0x120] sm:$0xff]
    %v1853 = vld [vmem:[#allocation7 + $0x128] sm:$0xff]
    %v1854 = vld [vmem:[#allocation7 + $0x130] sm:$0xff]
    %v1855 = vld [vmem:[#allocation7 + $0x138] sm:$0xff]
    %v1856 = vld [vmem:[#allocation7 + $0x140] sm:$0xff]
    %v1857 = vld [vmem:[#allocation7 + $0x148] sm:$0xff]
    %v1858 = vld [vmem:[#allocation7 + $0x150] sm:$0xff]
    %v1859 = vld [vmem:[#allocation7 + $0x158] sm:$0xff]
    %v1860 = vld [vmem:[#allocation7 + $0x160] sm:$0xff]
    %v1861 = vld [vmem:[#allocation7 + $0x168] sm:$0xff]
    %v1862 = vld [vmem:[#allocation7 + $0x170] sm:$0xff]
    %v1863 = vld [vmem:[#allocation7 + $0x178] sm:$0xff]
    %v1864 = vld [vmem:[#allocation7 + $0x180] sm:$0xff]
    %v1865 = vld [vmem:[#allocation7 + $0x188] sm:$0xff]
    %v1866 = vld [vmem:[#allocation7 + $0x190] sm:$0xff]
    %v1867 = vld [vmem:[#allocation7 + $0x198] sm:$0xff]
    %v1868 = vld [vmem:[#allocation7 + $0x1a0] sm:$0xff]
    %v1869 = vld [vmem:[#allocation7 + $0x1a8] sm:$0xff]
    %v1870 = vld [vmem:[#allocation7 + $0x1b0] sm:$0xff]
    %v1871 = vld [vmem:[#allocation7 + $0x1b8] sm:$0xff]
    %v1872 = vld [vmem:[#allocation7 + $0x1c0] sm:$0xff]
    %v1873 = vld [vmem:[#allocation7 + $0x1c8] sm:$0xff]
    %v1874 = vld [vmem:[#allocation7 + $0x1d0] sm:$0xff]
    %v1875 = vld [vmem:[#allocation7 + $0x1d8] sm:$0xff]
    %v1876 = vld [vmem:[#allocation7 + $0x1e0] sm:$0xff]
    %v1877 = vld [vmem:[#allocation7 + $0x1e8] sm:$0xff]
    %v1878 = vld [vmem:[#allocation7 + $0x1f0] sm:$0xff]
    %v1879 = vld [vmem:[#allocation7 + $0x1f8] sm:$0xff]
    %v1880 = vld [vmem:[%s4] sm:$0x3]
    %v1882 = vlaneseq
    %v1883 = vshrl.u32 %v1882, 7
    %v1884 = vsub.s32 0, %v1883
    %v1885 = vrot.slane %v1880, %v1884
    %v1886 = vlaneseq
    %v1887 = vshrl.u32 %v1886, 7
    %v1888 = vsub.s32 1, %v1887
    %v1889 = vrot.slane %v1880, %v1888
    %v1956 = vunpack.c.l.b16 %v1816
    %v1957 = vunpack.c.h.b16 %v1816
    %v1958 = vunpack.c.l.b16 %v1817
    %v1959 = vunpack.c.h.b16 %v1817
    %v1960 = vunpack.c.l.b16 %v1818
    %v1961 = vunpack.c.h.b16 %v1818
    %v1962 = vunpack.c.l.b16 %v1819
    %v1963 = vunpack.c.h.b16 %v1819
    %v1964 = vunpack.c.l.b16 %v1820
    %v1965 = vunpack.c.h.b16 %v1820
    %v1966 = vunpack.c.l.b16 %v1821
    %v1967 = vunpack.c.h.b16 %v1821
    %v1968 = vunpack.c.l.b16 %v1822
    %v1969 = vunpack.c.h.b16 %v1822
    %v1970 = vunpack.c.l.b16 %v1823
    %v1971 = vunpack.c.h.b16 %v1823
    %v1972 = vunpack.c.l.b16 %v1824
    %v1973 = vunpack.c.h.b16 %v1824
    %v1974 = vunpack.c.l.b16 %v1825
    %v1975 = vunpack.c.h.b16 %v1825
    %v1976 = vunpack.c.l.b16 %v1826
    %v1977 = vunpack.c.h.b16 %v1826
    %v1978 = vunpack.c.l.b16 %v1827
    %v1979 = vunpack.c.h.b16 %v1827
    %v1980 = vunpack.c.l.b16 %v1828
    %v1981 = vunpack.c.h.b16 %v1828
    %v1982 = vunpack.c.l.b16 %v1829
    %v1983 = vunpack.c.h.b16 %v1829
    %v1984 = vunpack.c.l.b16 %v1830
    %v1985 = vunpack.c.h.b16 %v1830
    %v1986 = vunpack.c.l.b16 %v1831
    %v1987 = vunpack.c.h.b16 %v1831
    %v1988 = vunpack.c.l.b16 %v1832
    %v1989 = vunpack.c.h.b16 %v1832
    %v1990 = vunpack.c.l.b16 %v1833
    %v1991 = vunpack.c.h.b16 %v1833
    %v1992 = vunpack.c.l.b16 %v1834
    %v1993 = vunpack.c.h.b16 %v1834
    %v1994 = vunpack.c.l.b16 %v1835
    %v1995 = vunpack.c.h.b16 %v1835
    %v1996 = vunpack.c.l.b16 %v1836
    %v1997 = vunpack.c.h.b16 %v1836
    %v1998 = vunpack.c.l.b16 %v1837
    %v1999 = vunpack.c.h.b16 %v1837
    %v2000 = vunpack.c.l.b16 %v1838
    %v2001 = vunpack.c.h.b16 %v1838
    %v2002 = vunpack.c.l.b16 %v1839
    %v2003 = vunpack.c.h.b16 %v1839
    %v2004 = vunpack.c.l.b16 %v1840
    %v2005 = vunpack.c.h.b16 %v1840
    %v2006 = vunpack.c.l.b16 %v1841
    %v2007 = vunpack.c.h.b16 %v1841
    %v2008 = vunpack.c.l.b16 %v1842
    %v2009 = vunpack.c.h.b16 %v1842
    %v2010 = vunpack.c.l.b16 %v1843
    %v2011 = vunpack.c.h.b16 %v1843
    %v2012 = vunpack.c.l.b16 %v1844
    %v2013 = vunpack.c.h.b16 %v1844
    %v2014 = vunpack.c.l.b16 %v1845
    %v2015 = vunpack.c.h.b16 %v1845
    %v2016 = vunpack.c.l.b16 %v1846
    %v2017 = vunpack.c.h.b16 %v1846
    %v2018 = vunpack.c.l.b16 %v1847
    %v2019 = vunpack.c.h.b16 %v1847
    %v2020 = vunpack.c.l.b16 %v1848
    %v2021 = vunpack.c.h.b16 %v1848
    %v2022 = vunpack.c.l.b16 %v1849
    %v2023 = vunpack.c.h.b16 %v1849
    %v2024 = vunpack.c.l.b16 %v1850
    %v2025 = vunpack.c.h.b16 %v1850
    %v2026 = vunpack.c.l.b16 %v1851
    %v2027 = vunpack.c.h.b16 %v1851
    %v2028 = vunpack.c.l.b16 %v1852
    %v2029 = vunpack.c.h.b16 %v1852
    %v2030 = vunpack.c.l.b16 %v1853
    %v2031 = vunpack.c.h.b16 %v1853
    %v2032 = vunpack.c.l.b16 %v1854
    %v2033 = vunpack.c.h.b16 %v1854
    %v2034 = vunpack.c.l.b16 %v1855
    %v2035 = vunpack.c.h.b16 %v1855
    %v2036 = vunpack.c.l.b16 %v1856
    %v2037 = vunpack.c.h.b16 %v1856
    %v2038 = vunpack.c.l.b16 %v1857
    %v2039 = vunpack.c.h.b16 %v1857
    %v2040 = vunpack.c.l.b16 %v1858
    %v2041 = vunpack.c.h.b16 %v1858
    %v2042 = vunpack.c.l.b16 %v1859
    %v2043 = vunpack.c.h.b16 %v1859
    %v2044 = vunpack.c.l.b16 %v1860
    %v2045 = vunpack.c.h.b16 %v1860
    %v2046 = vunpack.c.l.b16 %v1861
    %v2047 = vunpack.c.h.b16 %v1861
    %v2048 = vunpack.c.l.b16 %v1862
    %v2049 = vunpack.c.h.b16 %v1862
    %v2050 = vunpack.c.l.b16 %v1863
    %v2051 = vunpack.c.h.b16 %v1863
    %v2052 = vunpack.c.l.b16 %v1864
    %v2053 = vunpack.c.h.b16 %v1864
    %v2054 = vunpack.c.l.b16 %v1865
    %v2055 = vunpack.c.h.b16 %v1865
    %v2056 = vunpack.c.l.b16 %v1866
    %v2057 = vunpack.c.h.b16 %v1866
    %v2058 = vunpack.c.l.b16 %v1867
    %v2059 = vunpack.c.h.b16 %v1867
    %v2060 = vunpack.c.l.b16 %v1868
    %v2061 = vunpack.c.h.b16 %v1868
    %v2062 = vunpack.c.l.b16 %v1869
    %v2063 = vunpack.c.h.b16 %v1869
    %v2064 = vunpack.c.l.b16 %v1870
    %v2065 = vunpack.c.h.b16 %v1870
    %v2066 = vunpack.c.l.b16 %v1871
    %v2067 = vunpack.c.h.b16 %v1871
    %v2068 = vunpack.c.l.b16 %v1872
    %v2069 = vunpack.c.h.b16 %v1872
    %v2070 = vunpack.c.l.b16 %v1873
    %v2071 = vunpack.c.h.b16 %v1873
    %v2072 = vunpack.c.l.b16 %v1874
    %v2073 = vunpack.c.h.b16 %v1874
    %v2074 = vunpack.c.l.b16 %v1875
    %v2075 = vunpack.c.h.b16 %v1875
    %v2076 = vunpack.c.l.b16 %v1876
    %v2077 = vunpack.c.h.b16 %v1876
    %v2078 = vunpack.c.l.b16 %v1877
    %v2079 = vunpack.c.h.b16 %v1877
    %v2080 = vunpack.c.l.b16 %v1878
    %v2081 = vunpack.c.h.b16 %v1878
    %v2082 = vunpack.c.l.b16 %v1879
    %v2083 = vunpack.c.h.b16 %v1879
    %v2084 = vpack.c.b16 %v1958, %v1956
    %v2085 = vpack.c.b16 %v1959, %v1957
    %v2086 = vpack.c.b16 %v1962, %v1960
    %v2087 = vpack.c.b16 %v1963, %v1961
    %v2088 = vpack.c.b16 %v1966, %v1964
    %v2089 = vpack.c.b16 %v1967, %v1965
    %v2090 = vpack.c.b16 %v1970, %v1968
    %v2091 = vpack.c.b16 %v1971, %v1969
    %v2092 = vpack.c.b16 %v1974, %v1972
    %v2093 = vpack.c.b16 %v1975, %v1973
    %v2094 = vpack.c.b16 %v1978, %v1976
    %v2095 = vpack.c.b16 %v1979, %v1977
    %v2096 = vpack.c.b16 %v1982, %v1980
    %v2097 = vpack.c.b16 %v1983, %v1981
    %v2098 = vpack.c.b16 %v1986, %v1984
    %v2099 = vpack.c.b16 %v1987, %v1985
    %v2100 = vpack.c.b16 %v1990, %v1988
    %v2101 = vpack.c.b16 %v1991, %v1989
    %v2102 = vpack.c.b16 %v1994, %v1992
    %v2103 = vpack.c.b16 %v1995, %v1993
    %v2104 = vpack.c.b16 %v1998, %v1996
    %v2105 = vpack.c.b16 %v1999, %v1997
    %v2106 = vpack.c.b16 %v2002, %v2000
    %v2107 = vpack.c.b16 %v2003, %v2001
    %v2108 = vpack.c.b16 %v2006, %v2004
    %v2109 = vpack.c.b16 %v2007, %v2005
    %v2110 = vpack.c.b16 %v2010, %v2008
    %v2111 = vpack.c.b16 %v2011, %v2009
    %v2112 = vpack.c.b16 %v2014, %v2012
    %v2113 = vpack.c.b16 %v2015, %v2013
    %v2114 = vpack.c.b16 %v2018, %v2016
    %v2115 = vpack.c.b16 %v2019, %v2017
    %v2116 = vpack.c.b16 %v2022, %v2020
    %v2117 = vpack.c.b16 %v2023, %v2021
    %v2118 = vpack.c.b16 %v2026, %v2024
    %v2119 = vpack.c.b16 %v2027, %v2025
    %v2120 = vpack.c.b16 %v2030, %v2028
    %v2121 = vpack.c.b16 %v2031, %v2029
    %v2122 = vpack.c.b16 %v2034, %v2032
    %v2123 = vpack.c.b16 %v2035, %v2033
    %v2124 = vpack.c.b16 %v2038, %v2036
    %v2125 = vpack.c.b16 %v2039, %v2037
    %v2126 = vpack.c.b16 %v2042, %v2040
    %v2127 = vpack.c.b16 %v2043, %v2041
    %v2128 = vpack.c.b16 %v2046, %v2044
    %v2129 = vpack.c.b16 %v2047, %v2045
    %v2130 = vpack.c.b16 %v2050, %v2048
    %v2131 = vpack.c.b16 %v2051, %v2049
    %v2132 = vpack.c.b16 %v2054, %v2052
    %v2133 = vpack.c.b16 %v2055, %v2053
    %v2134 = vpack.c.b16 %v2058, %v2056
    %v2135 = vpack.c.b16 %v2059, %v2057
    %v2136 = vpack.c.b16 %v2062, %v2060
    %v2137 = vpack.c.b16 %v2063, %v2061
    %v2138 = vpack.c.b16 %v2066, %v2064
    %v2139 = vpack.c.b16 %v2067, %v2065
    %v2140 = vpack.c.b16 %v2070, %v2068
    %v2141 = vpack.c.b16 %v2071, %v2069
    %v2142 = vpack.c.b16 %v2074, %v2072
    %v2143 = vpack.c.b16 %v2075, %v2073
    %v2144 = vpack.c.b16 %v2078, %v2076
    %v2145 = vpack.c.b16 %v2079, %v2077
    %v2146 = vpack.c.b16 %v2082, %v2080
    %v2147 = vpack.c.b16 %v2083, %v2081
    %2212 = vmatprep.subr.bf16.mxu0 %v2085
    %2213 = vmatpush1.bf16.msra.mxu0 %v2084
    %2214 = vmatprep.subr.bf16.mxu0 %v2087
    %2215 = vmatpush1.bf16.msra.mxu0 %v2086
    %2216 = vmatprep.subr.bf16.mxu0 %v2089
    %2217 = vmatpush1.bf16.msra.mxu0 %v2088
    %2218 = vmatprep.subr.bf16.mxu0 %v2091
    %2219 = vmatpush1.bf16.msra.mxu0 %v2090
    %2220 = vmatprep.subr.bf16.mxu0 %v2093
    %2221 = vmatpush1.bf16.msra.mxu0 %v2092
    %2222 = vmatprep.subr.bf16.mxu0 %v2095
    %2223 = vmatpush1.bf16.msra.mxu0 %v2094
    %2224 = vmatprep.subr.bf16.mxu0 %v2097
    %2225 = vmatpush1.bf16.msra.mxu0 %v2096
    %2226 = vmatprep.subr.bf16.mxu0 %v2099
    %2227 = vmatpush1.bf16.msra.mxu0 %v2098
    %2228 = vmatprep.subr.bf16.mxu0 %v2101
    %2229 = vmatpush1.bf16.msra.mxu0 %v2100
    %2230 = vmatprep.subr.bf16.mxu0 %v2103
    %2231 = vmatpush1.bf16.msra.mxu0 %v2102
    %2232 = vmatprep.subr.bf16.mxu0 %v2105
    %2233 = vmatpush1.bf16.msra.mxu0 %v2104
    %2234 = vmatprep.subr.bf16.mxu0 %v2107
    %2235 = vmatpush1.bf16.msra.mxu0 %v2106
    %2236 = vmatprep.subr.bf16.mxu0 %v2109
    %2237 = vmatpush1.bf16.msra.mxu0 %v2108
    %2238 = vmatprep.subr.bf16.mxu0 %v2111
    %2239 = vmatpush1.bf16.msra.mxu0 %v2110
    %2240 = vmatprep.subr.bf16.mxu0 %v2113
    %2241 = vmatpush1.bf16.msra.mxu0 %v2112
    %2242 = vmatprep.subr.bf16.mxu0 %v2115
    %2243 = vmatpush1.bf16.msra.mxu0 %v2114
    %2244 = vmatprep.mubr.bf16.mxu0 %v1813
    %2245 = vmatmul.mubr.bf16.gmra.mrb[0].mxu0 %v1812
    %v2246 = vpop.f32.mrb[0].mxu0
    %v2247 = vadd.f32 %v1885, %v2246
    %v2248 = vpop.f32.mrb[0].mxu0
    %v2249 = vadd.f32 %v1889, %v2248
    %v2250 = vpop.f32.mrb[0].mxu0
    %v2251 = vpop.f32.mrb[0].mxu0
    %2252 = vdwg.mxu0
    %2253 = vmatprep.subr.bf16.mxu0 %v2117
    %2254 = vmatpush1.bf16.msra.mxu0 %v2116
    %2255 = vmatprep.subr.bf16.mxu0 %v2119
    %2256 = vmatpush1.bf16.msra.mxu0 %v2118
    %2257 = vmatprep.subr.bf16.mxu0 %v2121
    %2258 = vmatpush1.bf16.msra.mxu0 %v2120
    %2259 = vmatprep.subr.bf16.mxu0 %v2123
    %2260 = vmatpush1.bf16.msra.mxu0 %v2122
    %2261 = vmatprep.subr.bf16.mxu0 %v2125
    %2262 = vmatpush1.bf16.msra.mxu0 %v2124
    %2263 = vmatprep.subr.bf16.mxu0 %v2127
    %2264 = vmatpush1.bf16.msra.mxu0 %v2126
    %2265 = vmatprep.subr.bf16.mxu0 %v2129
    %2266 = vmatpush1.bf16.msra.mxu0 %v2128
    %2267 = vmatprep.subr.bf16.mxu0 %v2131
    %2268 = vmatpush1.bf16.msra.mxu0 %v2130
    %2269 = vmatprep.subr.bf16.mxu0 %v2133
    %2270 = vmatpush1.bf16.msra.mxu0 %v2132
    %2271 = vmatprep.subr.bf16.mxu0 %v2135
    %2272 = vmatpush1.bf16.msra.mxu0 %v2134
    %2273 = vmatprep.subr.bf16.mxu0 %v2137
    %2274 = vmatpush1.bf16.msra.mxu0 %v2136
    %2275 = vmatprep.subr.bf16.mxu0 %v2139
    %2276 = vmatpush1.bf16.msra.mxu0 %v2138
    %2277 = vmatprep.subr.bf16.mxu0 %v2141
    %2278 = vmatpush1.bf16.msra.mxu0 %v2140
    %2279 = vmatprep.subr.bf16.mxu0 %v2143
    %2280 = vmatpush1.bf16.msra.mxu0 %v2142
    %2281 = vmatprep.subr.bf16.mxu0 %v2145
    %2282 = vmatpush1.bf16.msra.mxu0 %v2144
    %2283 = vmatprep.subr.bf16.mxu0 %v2147
    %2284 = vmatpush1.bf16.msra.mxu0 %v2146
    %2285 = vmatprep.mubr.bf16.mxu0 %v1815
    %2286 = vmatmul.mubr.bf16.gmra.mrb[0].mxu0 %v1814
    %v2287 = vpop.f32.mrb[0].mxu0
    %v2288 = vadd.f32 %v2247, %v2287
    %v2289 = vpop.f32.mrb[0].mxu0
    %v2290 = vadd.f32 %v2249, %v2289
    %v2291 = vpop.f32.mrb[0].mxu0
    %v2292 = vpop.f32.mrb[0].mxu0
    %2293 = vdwg.mxu0
    %v2294 = vmax.f32 %v2288, 0.0
    %v2295 = vmax.f32 %v2290, 0.0
    %v2296 = vpack.c.bf16 %v2294, %v2294
    %v2297 = vpack.c.bf16 %v2295, %v2295
    %v2298 = vld [vmem:[#allocation8] sm:$0xf]
    %v2299 = vld [vmem:[#allocation8 + $0x4] sm:$0xf]
    %v2300 = vld [vmem:[#allocation8 + $0x8] sm:$0xf]
    %v2301 = vld [vmem:[#allocation8 + $0xc] sm:$0xf]
    %v2302 = vld [vmem:[#allocation8 + $0x10] sm:$0xf]
    %v2303 = vld [vmem:[#allocation8 + $0x14] sm:$0xf]
    %v2304 = vld [vmem:[#allocation8 + $0x18] sm:$0xf]
    %v2305 = vld [vmem:[#allocation8 + $0x1c] sm:$0xf]
    %v2306 = vld [vmem:[#allocation8 + $0x20] sm:$0xf]
    %v2307 = vld [vmem:[#allocation8 + $0x24] sm:$0xf]
    %v2308 = vld [vmem:[#allocation8 + $0x28] sm:$0xf]
    %v2309 = vld [vmem:[#allocation8 + $0x2c] sm:$0xf]
    %v2310 = vld [vmem:[#allocation8 + $0x30] sm:$0xf]
    %v2311 = vld [vmem:[#allocation8 + $0x34] sm:$0xf]
    %v2312 = vld [vmem:[#allocation8 + $0x38] sm:$0xf]
    %v2313 = vld [vmem:[#allocation8 + $0x3c] sm:$0xf]
    %v2314 = vld [vmem:[#allocation8 + $0x40] sm:$0xf]
    %v2315 = vld [vmem:[#allocation8 + $0x44] sm:$0xf]
    %v2316 = vld [vmem:[#allocation8 + $0x48] sm:$0xf]
    %v2317 = vld [vmem:[#allocation8 + $0x4c] sm:$0xf]
    %v2318 = vld [vmem:[#allocation8 + $0x50] sm:$0xf]
    %v2319 = vld [vmem:[#allocation8 + $0x54] sm:$0xf]
    %v2320 = vld [vmem:[#allocation8 + $0x58] sm:$0xf]
    %v2321 = vld [vmem:[#allocation8 + $0x5c] sm:$0xf]
    %v2322 = vld [vmem:[#allocation8 + $0x60] sm:$0xf]
    %v2323 = vld [vmem:[#allocation8 + $0x64] sm:$0xf]
    %v2324 = vld [vmem:[#allocation8 + $0x68] sm:$0xf]
    %v2325 = vld [vmem:[#allocation8 + $0x6c] sm:$0xf]
    %v2326 = vld [vmem:[#allocation8 + $0x70] sm:$0xf]
    %v2327 = vld [vmem:[#allocation8 + $0x74] sm:$0xf]
    %v2328 = vld [vmem:[#allocation8 + $0x78] sm:$0xf]
    %v2329 = vld [vmem:[#allocation8 + $0x7c] sm:$0xf]
    %v2330 = vld [vmem:[%s6] sm:$0x1]
    %v2332 = vlaneseq
    %v2333 = vshrl.u32 %v2332, 7
    %v2334 = vsub.s32 0, %v2333
    %v2335 = vrot.slane %v2330, %v2334
    %v2369 = vunpack.c.l.b16 %v2298
    %v2370 = vunpack.c.l.b16 %v2299
    %v2371 = vunpack.c.l.b16 %v2300
    %v2372 = vunpack.c.l.b16 %v2301
    %v2373 = vunpack.c.l.b16 %v2302
    %v2374 = vunpack.c.l.b16 %v2303
    %v2375 = vunpack.c.l.b16 %v2304
    %v2376 = vunpack.c.l.b16 %v2305
    %v2377 = vunpack.c.l.b16 %v2306
    %v2378 = vunpack.c.l.b16 %v2307
    %v2379 = vunpack.c.l.b16 %v2308
    %v2380 = vunpack.c.l.b16 %v2309
    %v2381 = vunpack.c.l.b16 %v2310
    %v2382 = vunpack.c.l.b16 %v2311
    %v2383 = vunpack.c.l.b16 %v2312
    %v2384 = vunpack.c.l.b16 %v2313
    %v2385 = vunpack.c.l.b16 %v2314
    %v2386 = vunpack.c.l.b16 %v2315
    %v2387 = vunpack.c.l.b16 %v2316
    %v2388 = vunpack.c.l.b16 %v2317
    %v2389 = vunpack.c.l.b16 %v2318
    %v2390 = vunpack.c.l.b16 %v2319
    %v2391 = vunpack.c.l.b16 %v2320
    %v2392 = vunpack.c.l.b16 %v2321
    %v2393 = vunpack.c.l.b16 %v2322
    %v2394 = vunpack.c.l.b16 %v2323
    %v2395 = vunpack.c.l.b16 %v2324
    %v2396 = vunpack.c.l.b16 %v2325
    %v2397 = vunpack.c.l.b16 %v2326
    %v2398 = vunpack.c.l.b16 %v2327
    %v2399 = vunpack.c.l.b16 %v2328
    %v2400 = vunpack.c.l.b16 %v2329
    %v2401 = vpack.c.b16 %v2370, %v2369
    %v2402 = vpack.c.b16 %v2372, %v2371
    %v2403 = vpack.c.b16 %v2374, %v2373
    %v2404 = vpack.c.b16 %v2376, %v2375
    %v2405 = vpack.c.b16 %v2378, %v2377
    %v2406 = vpack.c.b16 %v2380, %v2379
    %v2407 = vpack.c.b16 %v2382, %v2381
    %v2408 = vpack.c.b16 %v2384, %v2383
    %v2409 = vpack.c.b16 %v2386, %v2385
    %v2410 = vpack.c.b16 %v2388, %v2387
    %v2411 = vpack.c.b16 %v2390, %v2389
    %v2412 = vpack.c.b16 %v2392, %v2391
    %v2413 = vpack.c.b16 %v2394, %v2393
    %v2414 = vpack.c.b16 %v2396, %v2395
    %v2415 = vpack.c.b16 %v2398, %v2397
    %v2416 = vpack.c.b16 %v2400, %v2399
    %2433 = vmatprep.subr.bf16.mxu0 0
    %2434 = vmatpush1.bf16.msra.mxu0 %v2401
    %2435 = vmatprep.subr.bf16.mxu0 0
    %2436 = vmatpush1.bf16.msra.mxu0 %v2402
    %2437 = vmatprep.subr.bf16.mxu0 0
    %2438 = vmatpush1.bf16.msra.mxu0 %v2403
    %2439 = vmatprep.subr.bf16.mxu0 0
    %2440 = vmatpush1.bf16.msra.mxu0 %v2404
    %2441 = vmatprep.subr.bf16.mxu0 0
    %2442 = vmatpush1.bf16.msra.mxu0 %v2405
    %2443 = vmatprep.subr.bf16.mxu0 0
    %2444 = vmatpush1.bf16.msra.mxu0 %v2406
    %2445 = vmatprep.subr.bf16.mxu0 0
    %2446 = vmatpush1.bf16.msra.mxu0 %v2407
    %2447 = vmatprep.subr.bf16.mxu0 0
    %2448 = vmatpush1.bf16.msra.mxu0 %v2408
    %2449 = vmatprep.subr.bf16.mxu0 0
    %2450 = vmatpush1.bf16.msra.mxu0 %v2409
    %2451 = vmatprep.subr.bf16.mxu0 0
    %2452 = vmatpush1.bf16.msra.mxu0 %v2410
    %2453 = vmatprep.subr.bf16.mxu0 0
    %2454 = vmatpush1.bf16.msra.mxu0 %v2411
    %2455 = vmatprep.subr.bf16.mxu0 0
    %2456 = vmatpush1.bf16.msra.mxu0 %v2412
    %2457 = vmatprep.subr.bf16.mxu0 0
    %2458 = vmatpush1.bf16.msra.mxu0 %v2413
    %2459 = vmatprep.subr.bf16.mxu0 0
    %2460 = vmatpush1.bf16.msra.mxu0 %v2414
    %2461 = vmatprep.subr.bf16.mxu0 0
    %2462 = vmatpush1.bf16.msra.mxu0 %v2415
    %2463 = vmatprep.subr.bf16.mxu0 0
    %2464 = vmatpush1.bf16.msra.mxu0 %v2416
    %2465 = vmatprep.mubr.bf16.mxu0 %v2297
    %2466 = vmatmul.mubr.bf16.gmra.mrb[0].mxu0 %v2296
    %v2467 = vpop.f32.mrb[0].mxu0
    %v2468 = vadd.f32 %v2335, %v2467
    %v2469 = vpop.f32.mrb[0].mxu0
    %v2470 = vpop.f32.mrb[0].mxu0
    %v2471 = vpop.f32.mrb[0].mxu0
    %2472 = vdwg.mxu0
    %v2473 = vmax.f32 %v2468, 0.0
    %v2474 = vpack.c.bf16 %v2473, %v2473
    %v2475 = vld [vmem:[#allocation10] sm:$0xf]
    %v2476 = vld [vmem:[#allocation10 + $0x4] sm:$0xf]
    %v2477 = vld [vmem:[#allocation10 + $0x8] sm:$0xf]
    %v2478 = vld [vmem:[#allocation10 + $0xc] sm:$0xf]
    %v2479 = vld [vmem:[#allocation10 + $0x10] sm:$0xf]
    %v2480 = vld [vmem:[#allocation10 + $0x14] sm:$0xf]
    %v2481 = vld [vmem:[#allocation10 + $0x18] sm:$0xf]
    %v2482 = vld [vmem:[#allocation10 + $0x1c] sm:$0xf]
    %v2483 = vld [vmem:[#allocation10 + $0x20] sm:$0xf]
    %v2484 = vld [vmem:[#allocation10 + $0x24] sm:$0xf]
    %v2485 = vld [vmem:[#allocation10 + $0x28] sm:$0xf]
    %v2486 = vld [vmem:[#allocation10 + $0x2c] sm:$0xf]
    %v2487 = vld [vmem:[#allocation10 + $0x30] sm:$0xf]
    %v2488 = vld [vmem:[#allocation10 + $0x34] sm:$0xf]
    %v2489 = vld [vmem:[#allocation10 + $0x38] sm:$0xf]
    %v2490 = vld [vmem:[#allocation10 + $0x3c] sm:$0xf]
    %v2491 = vld [vmem:[%s8] sm:$0x1]
    %v2493 = vlaneseq
    %v2494 = vshrl.u32 %v2493, 7
    %v2495 = vsub.s32 0, %v2494
    %v2496 = vrot.slane %v2491, %v2495
    %v2514 = vunpack.c.l.b16 %v2475
    %v2515 = vunpack.c.l.b16 %v2476
    %v2516 = vunpack.c.l.b16 %v2477
    %v2517 = vunpack.c.l.b16 %v2478
    %v2518 = vunpack.c.l.b16 %v2479
    %v2519 = vunpack.c.l.b16 %v2480
    %v2520 = vunpack.c.l.b16 %v2481
    %v2521 = vunpack.c.l.b16 %v2482
    %v2522 = vunpack.c.l.b16 %v2483
    %v2523 = vunpack.c.l.b16 %v2484
    %v2524 = vunpack.c.l.b16 %v2485
    %v2525 = vunpack.c.l.b16 %v2486
    %v2526 = vunpack.c.l.b16 %v2487
    %v2527 = vunpack.c.l.b16 %v2488
    %v2528 = vunpack.c.l.b16 %v2489
    %v2529 = vunpack.c.l.b16 %v2490
    %v2530 = vpack.c.b16 %v2515, %v2514
    %v2531 = vpack.c.b16 %v2517, %v2516
    %v2532 = vpack.c.b16 %v2519, %v2518
    %v2533 = vpack.c.b16 %v2521, %v2520
    %v2534 = vpack.c.b16 %v2523, %v2522
    %v2535 = vpack.c.b16 %v2525, %v2524
    %v2536 = vpack.c.b16 %v2527, %v2526
    %v2537 = vpack.c.b16 %v2529, %v2528
    %2546 = vmatprep.subr.bf16.mxu0 0
    %2547 = vmatpush1.bf16.msra.mxu0 %v2530
    %2548 = vmatprep.subr.bf16.mxu0 0
    %2549 = vmatpush1.bf16.msra.mxu0 %v2531
    %2550 = vmatprep.subr.bf16.mxu0 0
    %2551 = vmatpush1.bf16.msra.mxu0 %v2532
    %2552 = vmatprep.subr.bf16.mxu0 0
    %2553 = vmatpush1.bf16.msra.mxu0 %v2533
    %2554 = vmatprep.subr.bf16.mxu0 0
    %2555 = vmatpush1.bf16.msra.mxu0 %v2534
    %2556 = vmatprep.subr.bf16.mxu0 0
    %2557 = vmatpush1.bf16.msra.mxu0 %v2535
    %2558 = vmatprep.subr.bf16.mxu0 0
    %2559 = vmatpush1.bf16.msra.mxu0 %v2536
    %2560 = vmatprep.subr.bf16.mxu0 0
    %2561 = vmatpush1.bf16.msra.mxu0 %v2537
    %2562 = vmatprep.subr.bf16.mxu0 0
    %2563 = vmatpush1.bf16.msra.mxu0 0
    %2564 = vmatprep.subr.bf16.mxu0 0
    %2565 = vmatpush1.bf16.msra.mxu0 0
    %2566 = vmatprep.subr.bf16.mxu0 0
    %2567 = vmatpush1.bf16.msra.mxu0 0
    %2568 = vmatprep.subr.bf16.mxu0 0
    %2569 = vmatpush1.bf16.msra.mxu0 0
    %2570 = vmatprep.subr.bf16.mxu0 0
    %2571 = vmatpush1.bf16.msra.mxu0 0
    %2572 = vmatprep.subr.bf16.mxu0 0
    %2573 = vmatpush1.bf16.msra.mxu0 0
    %2574 = vmatprep.subr.bf16.mxu0 0
    %2575 = vmatpush1.bf16.msra.mxu0 0
    %2576 = vmatprep.subr.bf16.mxu0 0
    %2577 = vmatpush1.bf16.msra.mxu0 0
    %2578 = vmatprep.mubr.bf16.mxu0 0
    %2579 = vmatmul.mubr.bf16.gmra.mrb[0].mxu0 %v2474
    %v2580 = vpop.f32.mrb[0].mxu0
    %v2581 = vadd.f32 %v2496, %v2580
    %v2582 = vpop.f32.mrb[0].mxu0
    %v2583 = vpop.f32.mrb[0].mxu0
    %v2584 = vpop.f32.mrb[0].mxu0
    %2585 = vdwg.mxu0
    %2586 = vst [vmem:[#allocation11] sm:$0xff] %v2581
    // Predicated region
    $region58: #{tpu_custom_call.1} parent=1 // pred_check
      _
    $region59: #{tpu_custom_call.1} parent=1 // pred_check_branch
      %2588 = sbr.rel (0) target = $region61
    $region60: #{tpu_custom_call.1} parent=1 // pred_region
      %s2590 = ssub.s32 128, 128
      %2591 = vsyncadd [#allocation4], %s2590
      %s2593 = sshll.u32 [#allocation11], 4
      %s2594 = int_to_ptr.vmem [resolvable:$true] %s2593
      %2596 = dma.vmem_to_hbm [thread:$0]  %s2594, 128, %s9, [#allocation4]
    $region61: #{tpu_custom_call.1} parent=1 // pred_fallthru
      _
    // Predicated region
    $region62: #{tpu_custom_call.1} parent=1 // pred_check
      _
    $region63: #{tpu_custom_call.1} parent=1 // pred_check_branch
      %2598 = sbr.rel (0) target = $region65
    $region64: #{tpu_custom_call.1} parent=1 // pred_region
      %2599 = dma.done [#allocation4], 128
    $region65: #{tpu_custom_call.1} parent=1 // pred_fallthru
      _
    %2600 = vsyncpa [#allocation3], 1
    %2601 = vsyncpa [#allocation6], 1
    %2602 = vsyncpa [#allocation9], 1
    %2603 = vsyncpa [#allocation4], 1

</llo_original>
